<compile_context>
chip_gen: v6e
topology: v6e:2x2x1
jax: 0.10.0
libtpu: 0.0.40
codegen_flags: <defaults>
</compile_context>

<pallas_src>
import functools

import jax
import jax.numpy as jnp
from jax.experimental import pallas as pl
from jax.experimental.pallas import tpu as pltpu

LANE = 128      # lane width: last dim of every tile padded to this
SUBLANE = 8     # sublane granularity for the batch/row axis
_MIB = 1024 * 1024


def _round_up(x: int, m: int) -> int:
    return ((x + m - 1) // m) * m


def _detect_tpu():
    """Best-effort chip detection -> (physical VMEM bytes/core, 256-wide MXU?)."""
    kind = ""
    try:
        kind = jax.devices()[0].device_kind.lower()
    except Exception:
        pass
    vmem = 64 * _MIB          # conservative default (v7x: 64 MiB per TensorCore)
    wide_mxu = True           # v6e / v7x: 256-wide MXU -> tile_m up to 256 helps
    if ("v5e" in kind) or ("v5 lite" in kind) or ("v5lite" in kind):
        vmem, wide_mxu = 128 * _MIB, False   # v5e: 128 MiB VMEM, 128-wide MXU
    elif "v6" in kind:
        vmem, wide_mxu = 128 * _MIB, True    # v6e: 128 MiB VMEM
    return vmem, wide_mxu


# ----------------------------- Pallas kernels -------------------------------
def _fused_mlp_kernel(*refs, num_layers: int):
    """Fused multi-layer forward for one M-tile.

    refs layout: x_ref, (w0, b0), (w1, b1), ..., o_ref
      x_ref : (TILE_M, D0)   f32 or bf16 (cast to bf16 here for the MXU)
      w_i   : (D_i, D_{i+1}) bf16, full extent, lane-padded
      b_i   : (1, D_{i+1})   f32
      o_ref : (TILE_M, D_L)  f32, lane-dense
    """
    x_ref = refs[0]
    o_ref = refs[1 + 2 * num_layers]

    h = x_ref[...].astype(jnp.bfloat16)
    acc = None
    for li in range(num_layers):
        w_ref = refs[1 + 2 * li]
        b_ref = refs[2 + 2 * li]
        acc = jnp.dot(h, w_ref[...], preferred_element_type=jnp.float32)
        acc = acc + b_ref[...]                      # f32 bias broadcast
        if li < num_layers - 1:
            h = jnp.maximum(acc, 0.0).astype(jnp.bfloat16)
    o_ref[...] = acc.astype(o_ref.dtype)            # lane-dense f32 store


def _linear_kernel(x_ref, w_ref, b_ref, o_ref, acc_ref, *, apply_relu: bool):
    """Single Linear (+ optional ReLU), K-reduction over the last grid axis."""
    @pl.when(pl.program_id(2) == 0)
    def _():
        acc_ref[...] = jnp.zeros_like(acc_ref)

    acc_ref[...] += jnp.dot(x_ref[...].astype(jnp.bfloat16), w_ref[...],
                            preferred_element_type=jnp.float32)

    @pl.when(pl.program_id(2) == pl.num_programs(2) - 1)
    def _():
        y = acc_ref[...] + b_ref[...]
        if apply_relu:
            y = jnp.maximum(y, 0.0)
        o_ref[...] = y.astype(o_ref.dtype)


# ----------------------------- parameter prep -------------------------------
def prepare_params(params, input_dim):
    """Pad (to lane multiples) and cast weights to bf16 ONCE; cache the result."""
    dims = [input_dim] + [w.shape[1] for (w, _) in params]
    dims_pad = [_round_up(d, LANE) for d in dims]
    w_pad, b_pad = [], []
    for li, (w, b) in enumerate(params):
        kp, np_ = dims_pad[li], dims_pad[li + 1]
        # Zero padding is self-consistent: padded K rows of W are zero and
        # padded N cols of b are zero, so padded columns stay exactly zero
        # through bias + ReLU and contribute nothing downstream.
        w_pad.append(jnp.pad(w.astype(jnp.bfloat16),
                             ((0, kp - w.shape[0]), (0, np_ - w.shape[1]))))
        b_pad.append(jnp.pad(b.astype(jnp.float32),
                             (0, np_ - b.shape[0])).reshape(1, np_))
    return dict(dims=dims, dims_pad=dims_pad, w=w_pad, b=b_pad)


# ------------------------------ tiling helpers -------------------------------
def _pick_tile_m(M, dims_pad, budget, wide_mxu, resident_w):
    max_d = max(dims_pad)

    def act(tm):  # worst case: f32 x tile + f32 out tile, both double-buffered
        return 2 * tm * dims_pad[0] * 4 + 2 * tm * dims_pad[-1] * 4 + tm * max_d * 6

    # 256-row tiles better fill the 2x256x256 MXU of v6e/v7x; only if VMEM allows.
    if wide_mxu and M >= 512 and resident_w + act(256) <= budget:
        return 256
    if M > 256:
        return 128
    # Small/medium M: guarantee >=2 grid steps so the "parallel" axis can shard
    # across v7x's 2 TensorCores (near-free overhead on single-TC chips).
    if M > SUBLANE:
        return min(128, _round_up((M + 1) // 2, SUBLANE))
    return _round_up(max(M, 1), SUBLANE)


def _pick_tile(dim_pad, pref=512):
    for t in (pref, 512, 256, 128):
        if t <= dim_pad and dim_pad % t == 0:
            return t
    return dim_pad


# ------------------------------- fused path ---------------------------------
def _fused_call(x_in, prep, tile_m, m_pad, vmem_limit, single_buffer_weights):
    num_layers = len(prep["w"])
    dims_pad = prep["dims_pad"]
    d0, dl = dims_pad[0], dims_pad[-1]

    def wspec(shape):
        if single_buffer_weights:
            # Constant index_map: block never changes -> 1 buffer is enough
            # (halves resident-weight VMEM vs default double buffering).
            return pl.BlockSpec(shape, lambda i: (0, 0),
                                pipeline_mode=pl.Buffered(1))
        return pl.BlockSpec(shape, lambda i: (0, 0))

    inputs = [x_in]
    in_specs = [pl.BlockSpec((tile_m, d0), lambda i: (i, 0))]
    flops = 0
    bytes_accessed = int(x_in.size) * x_in.dtype.itemsize
    for li in range(num_layers):
        kp, np_ = dims_pad[li], dims_pad[li + 1]
        inputs.extend([prep["w"][li], prep["b"][li]])
        in_specs.append(wspec((kp, np_)))
        in_specs.append(wspec((1, np_)))
        flops += 2 * m_pad * kp * np_
        bytes_accessed += kp * np_ * 2 + np_ * 4
    bytes_accessed += m_pad * dl * 4

    kernel = functools.partial(_fused_mlp_kernel, num_layers=num_layers)
    return pl.pallas_call(
        kernel,
        out_shape=jax.ShapeDtypeStruct((m_pad, dl), jnp.float32),
        grid=(m_pad // tile_m,),
        in_specs=in_specs,
        out_specs=pl.BlockSpec((tile_m, dl), lambda i: (i, 0)),
        compiler_params=pltpu.CompilerParams(
            dimension_semantics=("parallel",),
            vmem_limit_bytes=vmem_limit),
        cost_estimate=pl.CostEstimate(flops=flops, transcendentals=0,
                                      bytes_accessed=bytes_accessed),
    )(*inputs)


# ---------------------------- layer-wise fallback ----------------------------
# Used when the padded weights do not fit the VMEM budget (e.g. big models on
# v7x's 64 MiB VMEM).  Activations round-trip HBM between layers but each
# layer is still a tiled Pallas matmul.
# TODO(synk): replace with an in-kernel streamed-weight path (memory_space=
# pl.ANY + manual double-buffered DMA over N-column blocks) to keep the fused
# single-kernel design for over-budget weights.
def _linear_pallas(x_p, w_p, b_p, *, apply_relu, out_dtype, tile_m, vmem_limit):
    m_pad, k_pad = x_p.shape
    _, n_pad = w_p.shape
    tk = _pick_tile(k_pad)
    tn = _pick_tile(n_pad)
    kernel = functools.partial(_linear_kernel, apply_relu=apply_relu)
    return pl.pallas_call(
        kernel,
        out_shape=jax.ShapeDtypeStruct((m_pad, n_pad), out_dtype),
        grid=(m_pad // tile_m, n_pad // tn, k_pad // tk),
        in_specs=[pl.BlockSpec((tile_m, tk), lambda i, j, k: (i, k)),
                  pl.BlockSpec((tk, tn), lambda i, j, k: (k, j)),
                  pl.BlockSpec((1, tn), lambda i, j, k: (0, j))],
        out_specs=pl.BlockSpec((tile_m, tn), lambda i, j, k: (i, j)),
        scratch_shapes=[pltpu.VMEM((tile_m, tn), jnp.float32)],
        compiler_params=pltpu.CompilerParams(
            dimension_semantics=("parallel", "parallel", "arbitrary"),
            vmem_limit_bytes=vmem_limit),
    )(x_p, w_p, b_p)


def _layerwise_call(x_in, prep, tile_m, m_pad, vmem_limit):
    num_layers = len(prep["w"])
    h = x_in
    for li in range(num_layers):
        last = (li == num_layers - 1)
        h = _linear_pallas(h, prep["w"][li], prep["b"][li],
                           apply_relu=not last,
                           out_dtype=jnp.float32 if last else jnp.bfloat16,
                           tile_m=tile_m, vmem_limit=vmem_limit)
    return h


def _run(mode, x_in, prep, tile_m, m_pad, vmem_limit):
    if mode == "fused_buf1":
        return _fused_call(x_in, prep, tile_m, m_pad, vmem_limit, True)
    if mode == "fused":
        return _fused_call(x_in, prep, tile_m, m_pad, vmem_limit, False)
    if mode == "layerwise":
        return _layerwise_call(x_in, prep, tile_m, m_pad, vmem_limit)
    raise ValueError(f"unknown mode {mode}")


# --------------------------------- wrapper -----------------------------------
def mlp_forward_pallas(x, prep, *, mode=None):
    """Forward pass.  Returns (output, resolved_mode) so callers can cache mode."""
    dims, dims_pad = prep["dims"], prep["dims_pad"]
    lead = x.shape[:-1]
    x2 = x.reshape(-1, x.shape[-1])
    M, K0 = x2.shape
    assert K0 == dims[0], (K0, dims[0])

    vmem_phys, wide_mxu = _detect_tpu()
    budget = int(vmem_phys * 0.80)
    resident_w = (sum(int(w.size) * 2 for w in prep["w"])
                  + sum(int(b.size) * 4 for b in prep["b"]))

    tile_m = _pick_tile_m(M, dims_pad, budget, wide_mxu, resident_w)
    m_pad = _round_up(M, tile_m)

    # Skip the wrapper-side pad/cast HBM pass when x is already lane/tile
    # aligned; the kernel casts to bf16 internally.
    need_pad = (K0 != dims_pad[0]) or (m_pad != M)
    if need_pad:
        x_in = jnp.pad(x2.astype(jnp.bfloat16),
                       ((0, m_pad - M), (0, dims_pad[0] - K0)))
    else:
        x_in = x2

    act_bytes = (2 * tile_m * dims_pad[0] * x_in.dtype.itemsize
                 + 2 * tile_m * dims_pad[-1] * 4
                 + tile_m * max(dims_pad) * 6)
    # Explicit scoped-VMEM limit (defaults are only 16/32 MiB); generous but
    # capped below the physical VMEM of the detected chip.
    vmem_limit = min(int(vmem_phys * 0.9),
                     max(32 * _MIB, int((2 * resident_w + act_bytes) * 1.3)))

    fused_fits = resident_w + act_bytes <= budget   # single-buffered weights

    if mode is None:
        candidates = (["fused_buf1", "fused"] if fused_fits else []) + ["layerwise"]
    else:
        candidates = [mode]

    out_pad, used, err = None, None, None
    for cand in candidates:
        try:
            out_pad = _run(cand, x_in, prep, tile_m, m_pad, vmem_limit)
            if len(candidates) > 1:
                out_pad = jax.block_until_ready(out_pad)  # surface compile errors
            used = cand
            break
        except Exception as e:  # fall back to the next, more conservative path
            err, out_pad = e, None
    if out_pad is None:
        raise err

    out = out_pad
    if (m_pad != M) or (dims_pad[-1] != dims[-1]):   # skip slice when nothing padded
        out = out[:M, :dims[-1]]
    return out.reshape(*lead, dims[-1]), used


# --------------------------------- MLP module --------------------------------
class MLP:
    """JAX/Pallas port of the PyTorch MLP (simple FFN)."""

    def __init__(self, input_dim, hidden_dim, output_dim, num_layers, key):
        self.num_layers = num_layers
        h = [hidden_dim] * (num_layers - 1)
        self.params = []
        for n, k in zip([input_dim] + h, h + [output_dim]):
            key, wk, bk = jax.random.split(key, 3)
            # Mirrors nn.Linear's U(-1/sqrt(n), 1/sqrt(n)) init; W stored (in, out).
            bound = 1.0 / (n ** 0.5)
            w = jax.random.uniform(wk, (n, k), jnp.float32, -bound, bound)
            b = jax.random.uniform(bk, (k,), jnp.float32, -bound, bound)
            self.params.append((w, b))
        # Pad/cast weights to bf16 ONCE (cached) -- no per-call pad/cast passes.
        self.prepared = prepare_params(self.params, input_dim)
        self._mode = None   # resolved execution mode, cached after first call

    def __call__(self, x):
        out, self._mode = mlp_forward_pallas(x, self.prepared, mode=self._mode)
        return out


# --------------------------------- references --------------------------------
def mlp_ref_bf16(params, x):
    """Reference emulating the kernel's bf16 MXU inputs / f32 accumulation."""
    lead = x.shape[:-1]
    x2 = x.reshape(-1, x.shape[-1]).astype(jnp.bfloat16).astype(jnp.float32)
    n = len(params)
    for i, (w, b) in enumerate(params):
        wb = w.astype(jnp.bfloat16).astype(jnp.float32)
        y = x2 @ wb + b
        x2 = jnp.maximum(y, 0.0).astype(jnp.bfloat16).astype(jnp.float32) if i < n - 1 else y
    return x2.reshape(*lead, x2.shape[-1])


def mlp_ref_f32(params, x):
    """Pure f32 reference (matches the PyTorch module exactly)."""
    lead = x.shape[:-1]
    x2 = x.reshape(-1, x.shape[-1])
    n = len(params)
    for i, (w, b) in enumerate(params):
        x2 = x2 @ w + b
        if i < n - 1:
            x2 = jnp.maximum(x2, 0.0)
    return x2.reshape(*lead, x2.shape[-1])


if __name__ == "__main__":
    key = jax.random.PRNGKey(0)

    # ---- Test 1: unaligned dims (padding path), matches the PyTorch spec ----
    input_dim, hidden_dim, output_dim, num_layers = 32, 64, 16, 3
    batch = 8
    key, xkey, pkey = jax.random.split(key, 3)
    x = jax.random.normal(xkey, (batch, input_dim), jnp.float32)
    mlp = MLP(input_dim, hidden_dim, output_dim, num_layers, pkey)

    out = jax.block_until_ready(mlp(x))
    assert out.shape == (batch, output_dim), out.shape
    assert jnp.allclose(out, mlp_ref_bf16(mlp.params, x), atol=2e-3, rtol=2e-3), \
        "mismatch vs bf16 reference"
    assert jnp.allclose(out, mlp_ref_f32(mlp.params, x), atol=5e-2, rtol=5e-2), \
        "mismatch vs f32 reference"

    # Second call uses the cached resolved mode (no fallback probing).
    out2 = jax.block_until_ready(mlp(x))
    assert jnp.allclose(out, out2)

    # Explicit layer-wise fallback path (used when weights exceed VMEM budget).
    out_lw, _ = mlp_forward_pallas(x, mlp.prepared, mode="layerwise")
    out_lw = jax.block_until_ready(out_lw)
    assert jnp.allclose(out_lw, mlp_ref_bf16(mlp.params, x), atol=2e-3, rtol=2e-3), \
        "layerwise fallback mismatch"

    # ---- Test 2: lane/tile-aligned dims (no-pad fast path, >=2 grid steps) ----
    in2, hid2, out2d, nl2, batch2 = 128, 256, 128, 2, 64
    key, xkey2, pkey2 = jax.random.split(key, 3)
    xb = jax.random.normal(xkey2, (batch2, in2), jnp.float32)
    mlp2 = MLP(in2, hid2, out2d, nl2, pkey2)
    outb = jax.block_until_ready(mlp2(xb))
    assert outb.shape == (batch2, out2d)
    assert jnp.allclose(outb, mlp_ref_bf16(mlp2.params, xb), atol=2e-3, rtol=2e-3), \
        "mismatch vs bf16 reference (aligned case)"

    print("KERNEL_OK")
</pallas_src>

<mosaic_0001>
module attributes {stable_mosaic.version = 11 : i64} {
  func.func @_fused_mlp_kernel(%arg0: i32, %arg1: memref<8x128xbf16, #tpu.memory_space<vmem>>, %arg2: memref<128x128xbf16, #tpu.memory_space<vmem>>, %arg3: memref<1x128xf32, #tpu.memory_space<vmem>>, %arg4: memref<128x128xbf16, #tpu.memory_space<vmem>>, %arg5: memref<1x128xf32, #tpu.memory_space<vmem>>, %arg6: memref<128x128xbf16, #tpu.memory_space<vmem>>, %arg7: memref<1x128xf32, #tpu.memory_space<vmem>>, %arg8: memref<8x128xf32, #tpu.memory_space<vmem>>) attributes {dimension_semantics = [#tpu.dimension_semantics<parallel>], iteration_bounds = array<i64: 1>, scalar_prefetch = 0 : i64, scratch_operands = 0 : i64, tpu.core_type = #tpu.core_type<tc>, window_params = [{transform_indices = @transform_0, window_bounds = array<i64: 8, 128>}, {pipeline_mode = #tpu.pipeline_mode<synchronous>, transform_indices = @transform_1, window_bounds = array<i64: 128, 128>}, {pipeline_mode = #tpu.pipeline_mode<synchronous>, transform_indices = @transform_2, window_bounds = array<i64: 1, 128>}, {pipeline_mode = #tpu.pipeline_mode<synchronous>, transform_indices = @transform_3, window_bounds = array<i64: 128, 128>}, {pipeline_mode = #tpu.pipeline_mode<synchronous>, transform_indices = @transform_4, window_bounds = array<i64: 1, 128>}, {pipeline_mode = #tpu.pipeline_mode<synchronous>, transform_indices = @transform_5, window_bounds = array<i64: 128, 128>}, {pipeline_mode = #tpu.pipeline_mode<synchronous>, transform_indices = @transform_6, window_bounds = array<i64: 1, 128>}, {transform_indices = @transform_7, window_bounds = array<i64: 8, 128>}]} {
    %c0 = arith.constant 0 : index
    %c0_0 = arith.constant 0 : index
    %0 = vector.load %arg1[%c0, %c0_0] : memref<8x128xbf16, #tpu.memory_space<vmem>>, vector<8x128xbf16>
    %c0_1 = arith.constant 0 : index
    %c0_2 = arith.constant 0 : index
    %1 = vector.load %arg2[%c0_1, %c0_2] : memref<128x128xbf16, #tpu.memory_space<vmem>>, vector<128x128xbf16>
    %cst = arith.constant dense<0.000000e+00> : vector<8x128xf32>
    %2 = tpu.matmul %0, %1, %cst {dimension_numbers = #tpu.dot_dimension_numbers<[1], [0], [0], [1], [0, 0, 1, 1], [], []>} : vector<8x128xbf16>, vector<128x128xbf16>, vector<8x128xf32> -> vector<8x128xf32>
    %c0_3 = arith.constant 0 : index
    %c0_4 = arith.constant 0 : index
    %3 = vector.load %arg3[%c0_3, %c0_4] : memref<1x128xf32, #tpu.memory_space<vmem>>, vector<1x128xf32>
    %4 = vector.broadcast %3 : vector<1x128xf32> to vector<8x128xf32>
    %5 = arith.addf %2, %4 : vector<8x128xf32>
    %cst_5 = arith.constant 0.000000e+00 : f32
    %6 = vector.broadcast %cst_5 : f32 to vector<8x128xf32>
    %7 = arith.maximumf %5, %6 : vector<8x128xf32>
    %8 = arith.truncf %7 : vector<8x128xf32> to vector<8x128xbf16>
    %c0_6 = arith.constant 0 : index
    %c0_7 = arith.constant 0 : index
    %9 = vector.load %arg4[%c0_6, %c0_7] : memref<128x128xbf16, #tpu.memory_space<vmem>>, vector<128x128xbf16>
    %cst_8 = arith.constant dense<0.000000e+00> : vector<8x128xf32>
    %10 = tpu.matmul %8, %9, %cst_8 {dimension_numbers = #tpu.dot_dimension_numbers<[1], [0], [0], [1], [0, 0, 1, 1], [], []>} : vector<8x128xbf16>, vector<128x128xbf16>, vector<8x128xf32> -> vector<8x128xf32>
    %c0_9 = arith.constant 0 : index
    %c0_10 = arith.constant 0 : index
    %11 = vector.load %arg5[%c0_9, %c0_10] : memref<1x128xf32, #tpu.memory_space<vmem>>, vector<1x128xf32>
    %12 = vector.broadcast %11 : vector<1x128xf32> to vector<8x128xf32>
    %13 = arith.addf %10, %12 : vector<8x128xf32>
    %cst_11 = arith.constant 0.000000e+00 : f32
    %14 = vector.broadcast %cst_11 : f32 to vector<8x128xf32>
    %15 = arith.maximumf %13, %14 : vector<8x128xf32>
    %16 = arith.truncf %15 : vector<8x128xf32> to vector<8x128xbf16>
    %c0_12 = arith.constant 0 : index
    %c0_13 = arith.constant 0 : index
    %17 = vector.load %arg6[%c0_12, %c0_13] : memref<128x128xbf16, #tpu.memory_space<vmem>>, vector<128x128xbf16>
    %cst_14 = arith.constant dense<0.000000e+00> : vector<8x128xf32>
    %18 = tpu.matmul %16, %17, %cst_14 {dimension_numbers = #tpu.dot_dimension_numbers<[1], [0], [0], [1], [0, 0, 1, 1], [], []>} : vector<8x128xbf16>, vector<128x128xbf16>, vector<8x128xf32> -> vector<8x128xf32>
    %c0_15 = arith.constant 0 : index
    %c0_16 = arith.constant 0 : index
    %19 = vector.load %arg7[%c0_15, %c0_16] : memref<1x128xf32, #tpu.memory_space<vmem>>, vector<1x128xf32>
    %20 = vector.broadcast %19 : vector<1x128xf32> to vector<8x128xf32>
    %21 = arith.addf %18, %20 : vector<8x128xf32>
    %c0_17 = arith.constant 0 : index
    %c0_18 = arith.constant 0 : index
    %22 = vector.load %arg8[%c0_17, %c0_18] : memref<8x128xf32, #tpu.memory_space<vmem>>, vector<8x128xf32>
    tpu.vector_store %arg8[%c0_17, %c0_18], %21 {strides = array<i32>} : memref<8x128xf32, #tpu.memory_space<vmem>>, vector<8x128xf32>,
    return
  }
  func.func @transform_0(%arg0: i32) -> (i32, i32) {
    %c0_i32 = arith.constant 0 : i32
    %c0_i32_0 = arith.constant 0 : i32
    return %arg0, %c0_i32 : i32, i32
  }
  func.func @transform_1(%arg0: i32) -> (i32, i32) {
    %c0_i32 = arith.constant 0 : i32
    %c0_i32_0 = arith.constant 0 : i32
    %c0_i32_1 = arith.constant 0 : i32
    return %c0_i32, %c0_i32_0 : i32, i32
  }
  func.func @transform_2(%arg0: i32) -> (i32, i32) {
    %c0_i32 = arith.constant 0 : i32
    %c0_i32_0 = arith.constant 0 : i32
    %c0_i32_1 = arith.constant 0 : i32
    return %c0_i32, %c0_i32_0 : i32, i32
  }
  func.func @transform_3(%arg0: i32) -> (i32, i32) {
    %c0_i32 = arith.constant 0 : i32
    %c0_i32_0 = arith.constant 0 : i32
    %c0_i32_1 = arith.constant 0 : i32
    return %c0_i32, %c0_i32_0 : i32, i32
  }
  func.func @transform_4(%arg0: i32) -> (i32, i32) {
    %c0_i32 = arith.constant 0 : i32
    %c0_i32_0 = arith.constant 0 : i32
    %c0_i32_1 = arith.constant 0 : i32
    return %c0_i32, %c0_i32_0 : i32, i32
  }
  func.func @transform_5(%arg0: i32) -> (i32, i32) {
    %c0_i32 = arith.constant 0 : i32
    %c0_i32_0 = arith.constant 0 : i32
    %c0_i32_1 = arith.constant 0 : i32
    return %c0_i32, %c0_i32_0 : i32, i32
  }
  func.func @transform_6(%arg0: i32) -> (i32, i32) {
    %c0_i32 = arith.constant 0 : i32
    %c0_i32_0 = arith.constant 0 : i32
    %c0_i32_1 = arith.constant 0 : i32
    return %c0_i32, %c0_i32_0 : i32, i32
  }
  func.func @transform_7(%arg0: i32) -> (i32, i32) {
    %c0_i32 = arith.constant 0 : i32
    %c0_i32_0 = arith.constant 0 : i32
    return %arg0, %c0_i32 : i32, i32
  }
}

module attributes {stable_mosaic.version = 11 : i64} {
  func.func @_fused_mlp_kernel(%arg0: i32, %arg1: memref<8x128xbf16, #tpu.memory_space<vmem>>, %arg2: memref<128x128xbf16, #tpu.memory_space<vmem>>, %arg3: memref<1x128xf32, #tpu.memory_space<vmem>>, %arg4: memref<128x128xbf16, #tpu.memory_space<vmem>>, %arg5: memref<1x128xf32, #tpu.memory_space<vmem>>, %arg6: memref<128x128xbf16, #tpu.memory_space<vmem>>, %arg7: memref<1x128xf32, #tpu.memory_space<vmem>>, %arg8: memref<8x128xf32, #tpu.memory_space<vmem>>) attributes {dimension_semantics = [#tpu.dimension_semantics<parallel>], iteration_bounds = array<i64: 1>, scalar_prefetch = 0 : i64, scratch_operands = 0 : i64, tpu.core_type = #tpu.core_type<tc>, window_params = [{transform_indices = @transform_0, window_bounds = array<i64: 8, 128>}, {pipeline_mode = #tpu.pipeline_mode<synchronous>, transform_indices = @transform_1, window_bounds = array<i64: 128, 128>}, {pipeline_mode = #tpu.pipeline_mode<synchronous>, transform_indices = @transform_2, window_bounds = array<i64: 1, 128>}, {pipeline_mode = #tpu.pipeline_mode<synchronous>, transform_indices = @transform_3, window_bounds = array<i64: 128, 128>}, {pipeline_mode = #tpu.pipeline_mode<synchronous>, transform_indices = @transform_4, window_bounds = array<i64: 1, 128>}, {pipeline_mode = #tpu.pipeline_mode<synchronous>, transform_indices = @transform_5, window_bounds = array<i64: 128, 128>}, {pipeline_mode = #tpu.pipeline_mode<synchronous>, transform_indices = @transform_6, window_bounds = array<i64: 1, 128>}, {transform_indices = @transform_7, window_bounds = array<i64: 8, 128>}]} {
    %c0 = arith.constant 0 : index
    %c0_0 = arith.constant 0 : index
    %0 = vector.load %arg1[%c0, %c0_0] : memref<8x128xbf16, #tpu.memory_space<vmem>>, vector<8x128xbf16>
    %c0_1 = arith.constant 0 : index
    %c0_2 = arith.constant 0 : index
    %1 = vector.load %arg2[%c0_1, %c0_2] : memref<128x128xbf16, #tpu.memory_space<vmem>>, vector<128x128xbf16>
    %cst = arith.constant dense<0.000000e+00> : vector<8x128xf32>
    %2 = tpu.matmul %0, %1, %cst {dimension_numbers = #tpu.dot_dimension_numbers<[1], [0], [0], [1], [0, 0, 1, 1], [], []>} : vector<8x128xbf16>, vector<128x128xbf16>, vector<8x128xf32> -> vector<8x128xf32>
    %c0_3 = arith.constant 0 : index
    %c0_4 = arith.constant 0 : index
    %3 = vector.load %arg3[%c0_3, %c0_4] : memref<1x128xf32, #tpu.memory_space<vmem>>, vector<1x128xf32>
    %4 = vector.broadcast %3 : vector<1x128xf32> to vector<8x128xf32>
    %5 = arith.addf %2, %4 : vector<8x128xf32>
    %cst_5 = arith.constant 0.000000e+00 : f32
    %6 = vector.broadcast %cst_5 : f32 to vector<8x128xf32>
    %7 = arith.maximumf %5, %6 : vector<8x128xf32>
    %8 = arith.truncf %7 : vector<8x128xf32> to vector<8x128xbf16>
    %c0_6 = arith.constant 0 : index
    %c0_7 = arith.constant 0 : index
    %9 = vector.load %arg4[%c0_6, %c0_7] : memref<128x128xbf16, #tpu.memory_space<vmem>>, vector<128x128xbf16>
    %cst_8 = arith.constant dense<0.000000e+00> : vector<8x128xf32>
    %10 = tpu.matmul %8, %9, %cst_8 {dimension_numbers = #tpu.dot_dimension_numbers<[1], [0], [0], [1], [0, 0, 1, 1], [], []>} : vector<8x128xbf16>, vector<128x128xbf16>, vector<8x128xf32> -> vector<8x128xf32>
    %c0_9 = arith.constant 0 : index
    %c0_10 = arith.constant 0 : index
    %11 = vector.load %arg5[%c0_9, %c0_10] : memref<1x128xf32, #tpu.memory_space<vmem>>, vector<1x128xf32>
    %12 = vector.broadcast %11 : vector<1x128xf32> to vector<8x128xf32>
    %13 = arith.addf %10, %12 : vector<8x128xf32>
    %cst_11 = arith.constant 0.000000e+00 : f32
    %14 = vector.broadcast %cst_11 : f32 to vector<8x128xf32>
    %15 = arith.maximumf %13, %14 : vector<8x128xf32>
    %16 = arith.truncf %15 : vector<8x128xf32> to vector<8x128xbf16>
    %c0_12 = arith.constant 0 : index
    %c0_13 = arith.constant 0 : index
    %17 = vector.load %arg6[%c0_12, %c0_13] : memref<128x128xbf16, #tpu.memory_space<vmem>>, vector<128x128xbf16>
    %cst_14 = arith.constant dense<0.000000e+00> : vector<8x128xf32>
    %18 = tpu.matmul %16, %17, %cst_14 {dimension_numbers = #tpu.dot_dimension_numbers<[1], [0], [0], [1], [0, 0, 1, 1], [], []>} : vector<8x128xbf16>, vector<128x128xbf16>, vector<8x128xf32> -> vector<8x128xf32>
    %c0_15 = arith.constant 0 : index
    %c0_16 = arith.constant 0 : index
    %19 = vector.load %arg7[%c0_15, %c0_16] : memref<1x128xf32, #tpu.memory_space<vmem>>, vector<1x128xf32>
    %20 = vector.broadcast %19 : vector<1x128xf32> to vector<8x128xf32>
    %21 = arith.addf %18, %20 : vector<8x128xf32>
    %c0_17 = arith.constant 0 : index
    %c0_18 = arith.constant 0 : index
    %22 = vector.load %arg8[%c0_17, %c0_18] : memref<8x128xf32, #tpu.memory_space<vmem>>, vector<8x128xf32>
    tpu.vector_store %arg8[%c0_17, %c0_18], %21 {strides = array<i32>} : memref<8x128xf32, #tpu.memory_space<vmem>>, vector<8x128xf32>,
    return
  }
  func.func @transform_0(%arg0: i32) -> (i32, i32) {
    %c0_i32 = arith.constant 0 : i32
    %c0_i32_0 = arith.constant 0 : i32
    return %arg0, %c0_i32 : i32, i32
  }
  func.func @transform_1(%arg0: i32) -> (i32, i32) {
    %c0_i32 = arith.constant 0 : i32
    %c0_i32_0 = arith.constant 0 : i32
    %c0_i32_1 = arith.constant 0 : i32
    return %c0_i32, %c0_i32_0 : i32, i32
  }
  func.func @transform_2(%arg0: i32) -> (i32, i32) {
    %c0_i32 = arith.constant 0 : i32
    %c0_i32_0 = arith.constant 0 : i32
    %c0_i32_1 = arith.constant 0 : i32
    return %c0_i32, %c0_i32_0 : i32, i32
  }
  func.func @transform_3(%arg0: i32) -> (i32, i32) {
    %c0_i32 = arith.constant 0 : i32
    %c0_i32_0 = arith.constant 0 : i32
    %c0_i32_1 = arith.constant 0 : i32
    return %c0_i32, %c0_i32_0 : i32, i32
  }
  func.func @transform_4(%arg0: i32) -> (i32, i32) {
    %c0_i32 = arith.constant 0 : i32
    %c0_i32_0 = arith.constant 0 : i32
    %c0_i32_1 = arith.constant 0 : i32
    return %c0_i32, %c0_i32_0 : i32, i32
  }
  func.func @transform_5(%arg0: i32) -> (i32, i32) {
    %c0_i32 = arith.constant 0 : i32
    %c0_i32_0 = arith.constant 0 : i32
    %c0_i32_1 = arith.constant 0 : i32
    return %c0_i32, %c0_i32_0 : i32, i32
  }
  func.func @transform_6(%arg0: i32) -> (i32, i32) {
    %c0_i32 = arith.constant 0 : i32
    %c0_i32_0 = arith.constant 0 : i32
    %c0_i32_1 = arith.constant 0 : i32
    return %c0_i32, %c0_i32_0 : i32, i32
  }
  func.func @transform_7(%arg0: i32) -> (i32, i32) {
    %c0_i32 = arith.constant 0 : i32
    %c0_i32_0 = arith.constant 0 : i32
    return %arg0, %c0_i32 : i32, i32
  }
}

module attributes {stable_mosaic.version = 11 : i64} {
  func.func @_linear_kernel(%arg0: i32, %arg1: i32, %arg2: i32, %arg3: memref<8x128xbf16, #tpu.memory_space<vmem>>, %arg4: memref<128x128xbf16, #tpu.memory_space<vmem>>, %arg5: memref<1x128xf32, #tpu.memory_space<vmem>>, %arg6: memref<8x128xbf16, #tpu.memory_space<vmem>>, %arg7: memref<8x128xf32, #tpu.memory_space<vmem>>) attributes {dimension_semantics = [#tpu.dimension_semantics<parallel>, #tpu.dimension_semantics<parallel>, #tpu.dimension_semantics<arbitrary>], iteration_bounds = array<i64: 1, 1, 1>, scalar_prefetch = 0 : i64, scratch_operands = 1 : i64, tpu.core_type = #tpu.core_type<tc>, window_params = [{transform_indices = @transform_0, window_bounds = array<i64: 8, 128>}, {transform_indices = @transform_1, window_bounds = array<i64: 128, 128>}, {transform_indices = @transform_2, window_bounds = array<i64: 1, 128>}, {transform_indices = @transform_3, window_bounds = array<i64: 8, 128>}]} {
    %c0_i32 = arith.constant 0 : i32
    %0 = arith.cmpi eq, %arg2, %c0_i32 : i32
    %1 = arith.extui %0 : i1 to i32
    %c0_i32_0 = arith.constant 0 : i32
    %2 = arith.cmpi ne, %1, %c0_i32_0 : i32
    scf.if %2 {
      %cst_10 = arith.constant 0.000000e+00 : f32
      %12 = vector.broadcast %cst_10 : f32 to vector<8x128xf32>
      %c0_11 = arith.constant 0 : index
      %c0_12 = arith.constant 0 : index
      %13 = vector.load %arg7[%c0_11, %c0_12] : memref<8x128xf32, #tpu.memory_space<vmem>>, vector<8x128xf32>
      tpu.vector_store %arg7[%c0_11, %c0_12], %12 {strides = array<i32>} : memref<8x128xf32, #tpu.memory_space<vmem>>, vector<8x128xf32>,
    } else {
    }
    %c0 = arith.constant 0 : index
    %c0_1 = arith.constant 0 : index
    %3 = vector.load %arg7[%c0, %c0_1] : memref<8x128xf32, #tpu.memory_space<vmem>>, vector<8x128xf32>
    %c0_2 = arith.constant 0 : index
    %c0_3 = arith.constant 0 : index
    %4 = vector.load %arg3[%c0_2, %c0_3] : memref<8x128xbf16, #tpu.memory_space<vmem>>, vector<8x128xbf16>
    %c0_4 = arith.constant 0 : index
    %c0_5 = arith.constant 0 : index
    %5 = vector.load %arg4[%c0_4, %c0_5] : memref<128x128xbf16, #tpu.memory_space<vmem>>, vector<128x128xbf16>
    %cst = arith.constant dense<0.000000e+00> : vector<8x128xf32>
    %6 = tpu.matmul %4, %5, %cst {dimension_numbers = #tpu.dot_dimension_numbers<[1], [0], [0], [1], [0, 0, 1, 1], [], []>} : vector<8x128xbf16>, vector<128x128xbf16>, vector<8x128xf32> -> vector<8x128xf32>
    %7 = arith.addf %3, %6 : vector<8x128xf32>
    %c0_6 = arith.constant 0 : index
    %c0_7 = arith.constant 0 : index
    %8 = vector.load %arg7[%c0_6, %c0_7] : memref<8x128xf32, #tpu.memory_space<vmem>>, vector<8x128xf32>
    tpu.vector_store %arg7[%c0_6, %c0_7], %7 {strides = array<i32>} : memref<8x128xf32, #tpu.memory_space<vmem>>, vector<8x128xf32>,
    %c0_i32_8 = arith.constant 0 : i32
    %9 = arith.cmpi eq, %arg2, %c0_i32_8 : i32
    %10 = arith.extui %9 : i1 to i32
    %c0_i32_9 = arith.constant 0 : i32
    %11 = arith.cmpi ne, %10, %c0_i32_9 : i32
    scf.if %11 {
      %c0_10 = arith.constant 0 : index
      %c0_11 = arith.constant 0 : index
      %12 = vector.load %arg7[%c0_10, %c0_11] : memref<8x128xf32, #tpu.memory_space<vmem>>, vector<8x128xf32>
      %c0_12 = arith.constant 0 : index
      %c0_13 = arith.constant 0 : index
      %13 = vector.load %arg5[%c0_12, %c0_13] : memref<1x128xf32, #tpu.memory_space<vmem>>, vector<1x128xf32>
      %14 = vector.broadcast %13 : vector<1x128xf32> to vector<8x128xf32>
      %15 = arith.addf %12, %14 : vector<8x128xf32>
      %cst_14 = arith.constant 0.000000e+00 : f32
      %16 = vector.broadcast %cst_14 : f32 to vector<8x128xf32>
      %17 = arith.maximumf %15, %16 : vector<8x128xf32>
      %18 = arith.truncf %17 : vector<8x128xf32> to vector<8x128xbf16>
      %c0_15 = arith.constant 0 : index
      %c0_16 = arith.constant 0 : index
      %19 = vector.load %arg6[%c0_15, %c0_16] : memref<8x128xbf16, #tpu.memory_space<vmem>>, vector<8x128xbf16>
      tpu.vector_store %arg6[%c0_15, %c0_16], %18 {strides = array<i32>} : memref<8x128xbf16, #tpu.memory_space<vmem>>, vector<8x128xbf16>,
    } else {
    }
    return
  }
  func.func @transform_0(%arg0: i32, %arg1: i32, %arg2: i32) -> (i32, i32) {
    %c0_i32 = arith.constant 0 : i32
    return %arg0, %arg2 : i32, i32
  }
  func.func @transform_1(%arg0: i32, %arg1: i32, %arg2: i32) -> (i32, i32) {
    %c0_i32 = arith.constant 0 : i32
    return %arg2, %arg1 : i32, i32
  }
  func.func @transform_2(%arg0: i32, %arg1: i32, %arg2: i32) -> (i32, i32) {
    %c0_i32 = arith.constant 0 : i32
    %c0_i32_0 = arith.constant 0 : i32
    return %c0_i32, %arg1 : i32, i32
  }
  func.func @transform_3(%arg0: i32, %arg1: i32, %arg2: i32) -> (i32, i32) {
    %c0_i32 = arith.constant 0 : i32
    return %arg0, %arg1 : i32, i32
  }
}

</mosaic_0001>

<llo_original>
// kernel: tpu_custom_call.1
$region0: #{tpu_custom_call.1}
  #allocation0 [shape = 'u32[]', space=smem, size = 0x4, offset = 0x4, fixed_abs, tag = 'smem constant byte address 0x4 - core index']
  #allocation1 [shape = 'u32[144,128]{1,0:T(1,128)}', space=vmem, size = 0x12000, scoped, tag = 'internal scratch']
  %s0 = inlined_call_operand.hbm [shape: bf16[8,128], index: 0, kind: input, shape index: {}]
  %s1 = inlined_call_operand.hbm [shape: bf16[128,128], index: 1, kind: input, shape index: {}]
  %s2 = inlined_call_operand.vmem [shape: f32[1,128], index: 2, kind: input, shape index: {}]
  %s3 = inlined_call_operand.hbm [shape: bf16[128,128], index: 3, kind: input, shape index: {}]
  %s4 = inlined_call_operand.vmem [shape: f32[1,128], index: 4, kind: input, shape index: {}]
  %s5 = inlined_call_operand.hbm [shape: bf16[128,128], index: 5, kind: input, shape index: {}]
  %s6 = inlined_call_operand.vmem [shape: f32[1,128], index: 6, kind: input, shape index: {}]
  %s7 = inlined_call_operand.hbm [shape: f32[8,128], index: 7, kind: output, shape index: {}]
  %s8 = sld [smem:[#allocation0]]
  $region54: #{tpu_custom_call.1} parent=0
    _
  %s10 = ssub.s32 1, %s8
  %s11 = scalar_select 0, %s10, %s8
  $region1: #{tpu_custom_call.1} parent=0
    #allocation2 [shape = 'u8[2048]{0}', space=vmem, size = 0x800, scoped, tag = 'input window, operand 0, single buffered']
    #allocation3 [shape = 's32[1]{0}', space=sflag, size = 0x4, scoped, tag = 'scoped memory for tpu_custom_call.1']
    #allocation4 [shape = 's32[1]{0}', space=sflag, size = 0x4, scoped, tag = 'scoped memory for tpu_custom_call.1']
    #allocation5 [shape = 'u8[32768]{0}', space=vmem, size = 0x8000, scoped, tag = 'input window, operand 1, single buffered']
    #allocation6 [shape = 's32[1]{0}', space=sflag, size = 0x4, scoped, tag = 'scoped memory for tpu_custom_call.1']
    #allocation7 [shape = 'u8[32768]{0}', space=vmem, size = 0x8000, scoped, tag = 'input window, operand 3, single buffered']
    #allocation8 [shape = 'u8[32768]{0}', space=vmem, size = 0x8000, scoped, tag = 'input window, operand 5, single buffered']
    #allocation9 [shape = 's32[1]{0}', space=sflag, size = 0x4, scoped, tag = 'scoped memory for tpu_custom_call.1']
    #allocation10 [shape = 'u8[4096]{0}', space=vmem, size = 0x1000, scoped, tag = 'output window, operand 0, single buffered']
    %12 = vsyncpa [#allocation3], 0
    %13 = vsyncpa [#allocation6], 0
    %14 = vsyncpa [#allocation9], 0
    %15 = vsyncpa [#allocation4], 0
    // Predicated region
    $region2: #{tpu_custom_call.1} parent=1 // pred_check
      _
    $region3: #{tpu_custom_call.1} parent=1 // pred_check_branch
      %17 = sbr.rel (0) target = $region5
    $region4: #{tpu_custom_call.1} parent=1 // pred_region
      %s19 = ssub.s32 64, 64
      %20 = vsyncadd [#allocation3], %s19
      %s22 = sshll.u32 [#allocation2], 4
      %s23 = int_to_ptr.vmem [resolvable:$true] %s22
      %25 = dma.hbm_to_vmem [thread:$0]  %s0, 64, %s23, [#allocation3]
    $region5: #{tpu_custom_call.1} parent=1 // pred_fallthru
      _
    // Predicated region
    $region6: #{tpu_custom_call.1} parent=1 // pred_check
      _
    $region7: #{tpu_custom_call.1} parent=1 // pred_check_branch
      %27 = sbr.rel (0) target = $region9
    $region8: #{tpu_custom_call.1} parent=1 // pred_region
      %s29 = ssub.s32 1024, 1024
      %30 = vsyncadd [#allocation6], %s29
      %s31 = sshll.u32 [#allocation5], 4
      %s32 = int_to_ptr.vmem [resolvable:$true] %s31
      %37 = dma.hbm_to_vmem [thread:$0]  %s1, 1024, %s32, [#allocation6], 64, 64, 4
    $region9: #{tpu_custom_call.1} parent=1 // pred_fallthru
      _
    // Predicated region
    $region10: #{tpu_custom_call.1} parent=1 // pred_check
      _
    $region11: #{tpu_custom_call.1} parent=1 // pred_check_branch
      %39 = sbr.rel (0) target = $region13
    $region12: #{tpu_custom_call.1} parent=1 // pred_region
      _
    $region13: #{tpu_custom_call.1} parent=1 // pred_fallthru
      _
    // Predicated region
    $region14: #{tpu_custom_call.1} parent=1 // pred_check
      _
    $region15: #{tpu_custom_call.1} parent=1 // pred_check_branch
      %41 = sbr.rel (0) target = $region17
    $region16: #{tpu_custom_call.1} parent=1 // pred_region
      %s43 = ssub.s32 1024, 1024
      %44 = vsyncadd [#allocation6], %s43
      %s45 = sshll.u32 [#allocation7], 4
      %s46 = int_to_ptr.vmem [resolvable:$true] %s45
      %51 = dma.hbm_to_vmem [thread:$0]  %s3, 1024, %s46, [#allocation6], 64, 64, 4
    $region17: #{tpu_custom_call.1} parent=1 // pred_fallthru
      _
    // Predicated region
    $region18: #{tpu_custom_call.1} parent=1 // pred_check
      _
    $region19: #{tpu_custom_call.1} parent=1 // pred_check_branch
      %53 = sbr.rel (0) target = $region21
    $region20: #{tpu_custom_call.1} parent=1 // pred_region
      _
    $region21: #{tpu_custom_call.1} parent=1 // pred_fallthru
      _
    // Predicated region
    $region22: #{tpu_custom_call.1} parent=1 // pred_check
      _
    $region23: #{tpu_custom_call.1} parent=1 // pred_check_branch
      %55 = sbr.rel (0) target = $region25
    $region24: #{tpu_custom_call.1} parent=1 // pred_region
      %s57 = ssub.s32 1024, 1024
      %58 = vsyncadd [#allocation9], %s57
      %s59 = sshll.u32 [#allocation8], 4
      %s60 = int_to_ptr.vmem [resolvable:$true] %s59
      %65 = dma.hbm_to_vmem [thread:$0]  %s5, 1024, %s60, [#allocation9], 64, 64, 4
    $region25: #{tpu_custom_call.1} parent=1 // pred_fallthru
      _
    // Predicated region
    $region26: #{tpu_custom_call.1} parent=1 // pred_check
      _
    $region27: #{tpu_custom_call.1} parent=1 // pred_check_branch
      %67 = sbr.rel (0) target = $region29
    $region28: #{tpu_custom_call.1} parent=1 // pred_region
      _
    $region29: #{tpu_custom_call.1} parent=1 // pred_fallthru
      _
    // Predicated region
    $region30: #{tpu_custom_call.1} parent=1 // pred_check
      _
    $region31: #{tpu_custom_call.1} parent=1 // pred_check_branch
      %69 = sbr.rel (0) target = $region33
    $region32: #{tpu_custom_call.1} parent=1 // pred_region
      %70 = dma.done [#allocation3], 64
    $region33: #{tpu_custom_call.1} parent=1 // pred_fallthru
      _
    // Predicated region
    $region34: #{tpu_custom_call.1} parent=1 // pred_check
      _
    $region35: #{tpu_custom_call.1} parent=1 // pred_check_branch
      %72 = sbr.rel (0) target = $region37
    $region36: #{tpu_custom_call.1} parent=1 // pred_region
      %73 = dma.done [#allocation6], 1024
    $region37: #{tpu_custom_call.1} parent=1 // pred_fallthru
      _
    // Predicated region
    $region38: #{tpu_custom_call.1} parent=1 // pred_check
      _
    $region39: #{tpu_custom_call.1} parent=1 // pred_check_branch
      %75 = sbr.rel (0) target = $region41
    $region40: #{tpu_custom_call.1} parent=1 // pred_region
      %76 = dma.done [#allocation6], 1024
    $region41: #{tpu_custom_call.1} parent=1 // pred_fallthru
      _
    // Predicated region
    $region42: #{tpu_custom_call.1} parent=1 // pred_check
      _
    $region43: #{tpu_custom_call.1} parent=1 // pred_check_branch
      %78 = sbr.rel (0) target = $region45
    $region44: #{tpu_custom_call.1} parent=1 // pred_region
      %79 = dma.done [#allocation9], 1024
    $region45: #{tpu_custom_call.1} parent=1 // pred_fallthru
      _
    %v81 = vld [vmem:[#allocation2] sm:$0xf]
    %v82 = vld [vmem:[#allocation5] sm:$0xf]
    %v83 = vld [vmem:[#allocation5 + $0x4] sm:$0xf]
    %v84 = vld [vmem:[#allocation5 + $0x8] sm:$0xf]
    %v85 = vld [vmem:[#allocation5 + $0xc] sm:$0xf]
    %v86 = vld [vmem:[#allocation5 + $0x10] sm:$0xf]
    %v87 = vld [vmem:[#allocation5 + $0x14] sm:$0xf]
    %v88 = vld [vmem:[#allocation5 + $0x18] sm:$0xf]
    %v89 = vld [vmem:[#allocation5 + $0x1c] sm:$0xf]
    %v90 = vld [vmem:[#allocation5 + $0x20] sm:$0xf]
    %v91 = vld [vmem:[#allocation5 + $0x24] sm:$0xf]
    %v92 = vld [vmem:[#allocation5 + $0x28] sm:$0xf]
    %v93 = vld [vmem:[#allocation5 + $0x2c] sm:$0xf]
    %v94 = vld [vmem:[#allocation5 + $0x30] sm:$0xf]
    %v95 = vld [vmem:[#allocation5 + $0x34] sm:$0xf]
    %v96 = vld [vmem:[#allocation5 + $0x38] sm:$0xf]
    %v97 = vld [vmem:[#allocation5 + $0x3c] sm:$0xf]
    %v98 = vld [vmem:[%s2] sm:$0x1]
    %v100 = vlaneseq
    %v101 = vshrl.u32 %v100, 7
    %v102 = vsub.s32 0, %v101
    %v103 = vrot.slane %v98, %v102
    %v121 = vunpack.c.l.b16 %v82
    %v122 = vunpack.c.l.b16 %v83
    %v123 = vunpack.c.l.b16 %v84
    %v124 = vunpack.c.l.b16 %v85
    %v125 = vunpack.c.l.b16 %v86
    %v126 = vunpack.c.l.b16 %v87
    %v127 = vunpack.c.l.b16 %v88
    %v128 = vunpack.c.l.b16 %v89
    %v129 = vunpack.c.l.b16 %v90
    %v130 = vunpack.c.l.b16 %v91
    %v131 = vunpack.c.l.b16 %v92
    %v132 = vunpack.c.l.b16 %v93
    %v133 = vunpack.c.l.b16 %v94
    %v134 = vunpack.c.l.b16 %v95
    %v135 = vunpack.c.l.b16 %v96
    %v136 = vunpack.c.l.b16 %v97
    %v137 = vpack.c.b16 %v122, %v121
    %v138 = vpack.c.b16 %v124, %v123
    %v139 = vpack.c.b16 %v126, %v125
    %v140 = vpack.c.b16 %v128, %v127
    %v141 = vpack.c.b16 %v130, %v129
    %v142 = vpack.c.b16 %v132, %v131
    %v143 = vpack.c.b16 %v134, %v133
    %v144 = vpack.c.b16 %v136, %v135
    %153 = vmatprep.subr.bf16.mxu0 0
    %154 = vmatpush1.bf16.msra.mxu0 %v144
    %155 = vmatprep.subr.bf16.mxu0 0
    %156 = vmatpush1.bf16.msra.mxu0 %v143
    %157 = vmatprep.subr.bf16.mxu0 0
    %158 = vmatpush1.bf16.msra.mxu0 %v142
    %159 = vmatprep.subr.bf16.mxu0 0
    %160 = vmatpush1.bf16.msra.mxu0 %v141
    %161 = vmatprep.subr.bf16.mxu0 0
    %162 = vmatpush1.bf16.msra.mxu0 %v140
    %163 = vmatprep.subr.bf16.mxu0 0
    %164 = vmatpush1.bf16.msra.mxu0 %v139
    %165 = vmatprep.subr.bf16.mxu0 0
    %166 = vmatpush1.bf16.msra.mxu0 %v138
    %167 = vmatprep.subr.bf16.mxu0 0
    %168 = vmatpush1.bf16.msra.mxu0 %v137
    %169 = vmatprep.subr.bf16.mxu0 0
    %170 = vmatpush2.bf16.msra.mxu0 0
    %171 = vmatprep.subr.bf16.mxu0 0
    %172 = vmatpush2.bf16.msra.mxu0 0
    %173 = vmatprep.subr.bf16.mxu0 0
    %174 = vmatpush2.bf16.msra.mxu0 0
    %175 = vmatprep.subr.bf16.mxu0 0
    %176 = vmatpush2.bf16.msra.mxu0 0
    %177 = vmatprep.subr.bf16.mxu0 0
    %178 = vmatpush2.bf16.msra.mxu0 0
    %179 = vmatprep.subr.bf16.mxu0 0
    %180 = vmatpush2.bf16.msra.mxu0 0
    %181 = vmatprep.subr.bf16.mxu0 0
    %182 = vmatpush2.bf16.msra.mxu0 0
    %183 = vmatprep.subr.bf16.mxu0 0
    %184 = vmatpush2.bf16.msra.mxu0 0
    %185 = vmatprep.mubr.bf16.mxu0 0
    %186 = vmatmul.mubr.bf16.gmra.mxu0 %v81
    %v187 = vpop.f32.mrf.mxu0
    %v188 = vadd.f32 %v103, %v187
    %v189 = vpop.f32.mrf.mxu0
    %v190 = vpop.f32.mrf.mxu0
    %v191 = vpop.f32.mrf.mxu0
    %192 = vdwg.mxu0
    %v193 = vmax.f32 %v188, 0.0
    %v194 = vpack.c.bf16 %v193, %v193
    %v195 = vld [vmem:[#allocation7] sm:$0xf]
    %v196 = vld [vmem:[#allocation7 + $0x4] sm:$0xf]
    %v197 = vld [vmem:[#allocation7 + $0x8] sm:$0xf]
    %v198 = vld [vmem:[#allocation7 + $0xc] sm:$0xf]
    %v199 = vld [vmem:[#allocation7 + $0x10] sm:$0xf]
    %v200 = vld [vmem:[#allocation7 + $0x14] sm:$0xf]
    %v201 = vld [vmem:[#allocation7 + $0x18] sm:$0xf]
    %v202 = vld [vmem:[#allocation7 + $0x1c] sm:$0xf]
    %v203 = vld [vmem:[#allocation7 + $0x20] sm:$0xf]
    %v204 = vld [vmem:[#allocation7 + $0x24] sm:$0xf]
    %v205 = vld [vmem:[#allocation7 + $0x28] sm:$0xf]
    %v206 = vld [vmem:[#allocation7 + $0x2c] sm:$0xf]
    %v207 = vld [vmem:[#allocation7 + $0x30] sm:$0xf]
    %v208 = vld [vmem:[#allocation7 + $0x34] sm:$0xf]
    %v209 = vld [vmem:[#allocation7 + $0x38] sm:$0xf]
    %v210 = vld [vmem:[#allocation7 + $0x3c] sm:$0xf]
    %v211 = vld [vmem:[%s4] sm:$0x1]
    %v213 = vlaneseq
    %v214 = vshrl.u32 %v213, 7
    %v215 = vsub.s32 0, %v214
    %v216 = vrot.slane %v211, %v215
    %v234 = vunpack.c.l.b16 %v195
    %v235 = vunpack.c.l.b16 %v196
    %v236 = vunpack.c.l.b16 %v197
    %v237 = vunpack.c.l.b16 %v198
    %v238 = vunpack.c.l.b16 %v199
    %v239 = vunpack.c.l.b16 %v200
    %v240 = vunpack.c.l.b16 %v201
    %v241 = vunpack.c.l.b16 %v202
    %v242 = vunpack.c.l.b16 %v203
    %v243 = vunpack.c.l.b16 %v204
    %v244 = vunpack.c.l.b16 %v205
    %v245 = vunpack.c.l.b16 %v206
    %v246 = vunpack.c.l.b16 %v207
    %v247 = vunpack.c.l.b16 %v208
    %v248 = vunpack.c.l.b16 %v209
    %v249 = vunpack.c.l.b16 %v210
    %v250 = vpack.c.b16 %v235, %v234
    %v251 = vpack.c.b16 %v237, %v236
    %v252 = vpack.c.b16 %v239, %v238
    %v253 = vpack.c.b16 %v241, %v240
    %v254 = vpack.c.b16 %v243, %v242
    %v255 = vpack.c.b16 %v245, %v244
    %v256 = vpack.c.b16 %v247, %v246
    %v257 = vpack.c.b16 %v249, %v248
    %266 = vmatprep.subr.bf16.mxu0 0
    %267 = vmatpush1.bf16.msra.mxu0 %v257
    %268 = vmatprep.subr.bf16.mxu0 0
    %269 = vmatpush1.bf16.msra.mxu0 %v256
    %270 = vmatprep.subr.bf16.mxu0 0
    %271 = vmatpush1.bf16.msra.mxu0 %v255
    %272 = vmatprep.subr.bf16.mxu0 0
    %273 = vmatpush1.bf16.msra.mxu0 %v254
    %274 = vmatprep.subr.bf16.mxu0 0
    %275 = vmatpush1.bf16.msra.mxu0 %v253
    %276 = vmatprep.subr.bf16.mxu0 0
    %277 = vmatpush1.bf16.msra.mxu0 %v252
    %278 = vmatprep.subr.bf16.mxu0 0
    %279 = vmatpush1.bf16.msra.mxu0 %v251
    %280 = vmatprep.subr.bf16.mxu0 0
    %281 = vmatpush1.bf16.msra.mxu0 %v250
    %282 = vmatprep.subr.bf16.mxu0 0
    %283 = vmatpush2.bf16.msra.mxu0 0
    %284 = vmatprep.subr.bf16.mxu0 0
    %285 = vmatpush2.bf16.msra.mxu0 0
    %286 = vmatprep.subr.bf16.mxu0 0
    %287 = vmatpush2.bf16.msra.mxu0 0
    %288 = vmatprep.subr.bf16.mxu0 0
    %289 = vmatpush2.bf16.msra.mxu0 0
    %290 = vmatprep.subr.bf16.mxu0 0
    %291 = vmatpush2.bf16.msra.mxu0 0
    %292 = vmatprep.subr.bf16.mxu0 0
    %293 = vmatpush2.bf16.msra.mxu0 0
    %294 = vmatprep.subr.bf16.mxu0 0
    %295 = vmatpush2.bf16.msra.mxu0 0
    %296 = vmatprep.subr.bf16.mxu0 0
    %297 = vmatpush2.bf16.msra.mxu0 0
    %298 = vmatprep.mubr.bf16.mxu0 0
    %299 = vmatmul.mubr.bf16.gmra.mxu0 %v194
    %v300 = vpop.f32.mrf.mxu0
    %v301 = vadd.f32 %v216, %v300
    %v302 = vpop.f32.mrf.mxu0
    %v303 = vpop.f32.mrf.mxu0
    %v304 = vpop.f32.mrf.mxu0
    %305 = vdwg.mxu0
    %v306 = vmax.f32 %v301, 0.0
    %v307 = vpack.c.bf16 %v306, %v306
    %v308 = vld [vmem:[#allocation8] sm:$0xf]
    %v309 = vld [vmem:[#allocation8 + $0x4] sm:$0xf]
    %v310 = vld [vmem:[#allocation8 + $0x8] sm:$0xf]
    %v311 = vld [vmem:[#allocation8 + $0xc] sm:$0xf]
    %v312 = vld [vmem:[#allocation8 + $0x10] sm:$0xf]
    %v313 = vld [vmem:[#allocation8 + $0x14] sm:$0xf]
    %v314 = vld [vmem:[#allocation8 + $0x18] sm:$0xf]
    %v315 = vld [vmem:[#allocation8 + $0x1c] sm:$0xf]
    %v316 = vld [vmem:[#allocation8 + $0x20] sm:$0xf]
    %v317 = vld [vmem:[#allocation8 + $0x24] sm:$0xf]
    %v318 = vld [vmem:[#allocation8 + $0x28] sm:$0xf]
    %v319 = vld [vmem:[#allocation8 + $0x2c] sm:$0xf]
    %v320 = vld [vmem:[#allocation8 + $0x30] sm:$0xf]
    %v321 = vld [vmem:[#allocation8 + $0x34] sm:$0xf]
    %v322 = vld [vmem:[#allocation8 + $0x38] sm:$0xf]
    %v323 = vld [vmem:[#allocation8 + $0x3c] sm:$0xf]
    %v324 = vld [vmem:[%s6] sm:$0x1]
    %v326 = vlaneseq
    %v327 = vshrl.u32 %v326, 7
    %v328 = vsub.s32 0, %v327
    %v329 = vrot.slane %v324, %v328
    %v347 = vunpack.c.l.b16 %v308
    %v348 = vunpack.c.l.b16 %v309
    %v349 = vunpack.c.l.b16 %v310
    %v350 = vunpack.c.l.b16 %v311
    %v351 = vunpack.c.l.b16 %v312
    %v352 = vunpack.c.l.b16 %v313
    %v353 = vunpack.c.l.b16 %v314
    %v354 = vunpack.c.l.b16 %v315
    %v355 = vunpack.c.l.b16 %v316
    %v356 = vunpack.c.l.b16 %v317
    %v357 = vunpack.c.l.b16 %v318
    %v358 = vunpack.c.l.b16 %v319
    %v359 = vunpack.c.l.b16 %v320
    %v360 = vunpack.c.l.b16 %v321
    %v361 = vunpack.c.l.b16 %v322
    %v362 = vunpack.c.l.b16 %v323
    %v363 = vpack.c.b16 %v348, %v347
    %v364 = vpack.c.b16 %v350, %v349
    %v365 = vpack.c.b16 %v352, %v351
    %v366 = vpack.c.b16 %v354, %v353
    %v367 = vpack.c.b16 %v356, %v355
    %v368 = vpack.c.b16 %v358, %v357
    %v369 = vpack.c.b16 %v360, %v359
    %v370 = vpack.c.b16 %v362, %v361
    %379 = vmatprep.subr.bf16.mxu0 0
    %380 = vmatpush1.bf16.msra.mxu0 %v370
    %381 = vmatprep.subr.bf16.mxu0 0
    %382 = vmatpush1.bf16.msra.mxu0 %v369
    %383 = vmatprep.subr.bf16.mxu0 0
    %384 = vmatpush1.bf16.msra.mxu0 %v368
    %385 = vmatprep.subr.bf16.mxu0 0
    %386 = vmatpush1.bf16.msra.mxu0 %v367
    %387 = vmatprep.subr.bf16.mxu0 0
    %388 = vmatpush1.bf16.msra.mxu0 %v366
    %389 = vmatprep.subr.bf16.mxu0 0
    %390 = vmatpush1.bf16.msra.mxu0 %v365
    %391 = vmatprep.subr.bf16.mxu0 0
    %392 = vmatpush1.bf16.msra.mxu0 %v364
    %393 = vmatprep.subr.bf16.mxu0 0
    %394 = vmatpush1.bf16.msra.mxu0 %v363
    %395 = vmatprep.subr.bf16.mxu0 0
    %396 = vmatpush2.bf16.msra.mxu0 0
    %397 = vmatprep.subr.bf16.mxu0 0
    %398 = vmatpush2.bf16.msra.mxu0 0
    %399 = vmatprep.subr.bf16.mxu0 0
    %400 = vmatpush2.bf16.msra.mxu0 0
    %401 = vmatprep.subr.bf16.mxu0 0
    %402 = vmatpush2.bf16.msra.mxu0 0
    %403 = vmatprep.subr.bf16.mxu0 0
    %404 = vmatpush2.bf16.msra.mxu0 0
    %405 = vmatprep.subr.bf16.mxu0 0
    %406 = vmatpush2.bf16.msra.mxu0 0
    %407 = vmatprep.subr.bf16.mxu0 0
    %408 = vmatpush2.bf16.msra.mxu0 0
    %409 = vmatprep.subr.bf16.mxu0 0
    %410 = vmatpush2.bf16.msra.mxu0 0
    %411 = vmatprep.mubr.bf16.mxu0 0
    %412 = vmatmul.mubr.bf16.gmra.mxu0 %v307
    %v413 = vpop.f32.mrf.mxu0
    %v414 = vadd.f32 %v329, %v413
    %v415 = vpop.f32.mrf.mxu0
    %v416 = vpop.f32.mrf.mxu0
    %v417 = vpop.f32.mrf.mxu0
    %418 = vdwg.mxu0
    %419 = vst [vmem:[#allocation10] sm:$0xff] %v414
    // Predicated region
    $region46: #{tpu_custom_call.1} parent=1 // pred_check
      _
    $region47: #{tpu_custom_call.1} parent=1 // pred_check_branch
      %421 = sbr.rel (0) target = $region49
    $region48: #{tpu_custom_call.1} parent=1 // pred_region
      %s423 = ssub.s32 128, 128
      %424 = vsyncadd [#allocation4], %s423
      %s426 = sshll.u32 [#allocation10], 4
      %s427 = int_to_ptr.vmem [resolvable:$true] %s426
      %429 = dma.vmem_to_hbm [thread:$0]  %s427, 128, %s7, [#allocation4]
    $region49: #{tpu_custom_call.1} parent=1 // pred_fallthru
      _
    // Predicated region
    $region50: #{tpu_custom_call.1} parent=1 // pred_check
      _
    $region51: #{tpu_custom_call.1} parent=1 // pred_check_branch
      %431 = sbr.rel (0) target = $region53
    $region52: #{tpu_custom_call.1} parent=1 // pred_region
      %432 = dma.done [#allocation4], 128
    $region53: #{tpu_custom_call.1} parent=1 // pred_fallthru
      _
    %433 = vsyncpa [#allocation3], 1
    %434 = vsyncpa [#allocation6], 1
    %435 = vsyncpa [#allocation9], 1
    %436 = vsyncpa [#allocation4], 1

// kernel: tpu_custom_call.1
$region0: #{tpu_custom_call.1}
  #allocation0 [shape = 'u32[]', space=smem, size = 0x4, offset = 0x4, fixed_abs, tag = 'smem constant byte address 0x4 - core index']
  #allocation1 [shape = 'u32[144,128]{1,0:T(1,128)}', space=vmem, size = 0x12000, scoped, tag = 'internal scratch']
  %s0 = inlined_call_operand.hbm [shape: bf16[8,128], index: 0, kind: input, shape index: {}]
  %s1 = inlined_call_operand.hbm [shape: bf16[128,128], index: 1, kind: input, shape index: {}]
  %s2 = inlined_call_operand.vmem [shape: f32[1,128], index: 2, kind: input, shape index: {}]
  %s3 = inlined_call_operand.hbm [shape: bf16[128,128], index: 3, kind: input, shape index: {}]
  %s4 = inlined_call_operand.vmem [shape: f32[1,128], index: 4, kind: input, shape index: {}]
  %s5 = inlined_call_operand.hbm [shape: bf16[128,128], index: 5, kind: input, shape index: {}]
  %s6 = inlined_call_operand.vmem [shape: f32[1,128], index: 6, kind: input, shape index: {}]
  %s7 = inlined_call_operand.hbm [shape: f32[8,128], index: 7, kind: output, shape index: {}]
  %s8 = sld [smem:[#allocation0]]
  $region54: #{tpu_custom_call.1} parent=0
    _
  %s10 = ssub.s32 1, %s8
  %s11 = scalar_select 0, %s10, %s8
  $region1: #{tpu_custom_call.1} parent=0
    #allocation2 [shape = 'u8[2048]{0}', space=vmem, size = 0x800, scoped, tag = 'input window, operand 0, single buffered']
    #allocation3 [shape = 's32[1]{0}', space=sflag, size = 0x4, scoped, tag = 'scoped memory for tpu_custom_call.1']
    #allocation4 [shape = 's32[1]{0}', space=sflag, size = 0x4, scoped, tag = 'scoped memory for tpu_custom_call.1']
    #allocation5 [shape = 'u8[32768]{0}', space=vmem, size = 0x8000, scoped, tag = 'input window, operand 1, single buffered']
    #allocation6 [shape = 's32[1]{0}', space=sflag, size = 0x4, scoped, tag = 'scoped memory for tpu_custom_call.1']
    #allocation7 [shape = 'u8[32768]{0}', space=vmem, size = 0x8000, scoped, tag = 'input window, operand 3, single buffered']
    #allocation8 [shape = 'u8[32768]{0}', space=vmem, size = 0x8000, scoped, tag = 'input window, operand 5, single buffered']
    #allocation9 [shape = 's32[1]{0}', space=sflag, size = 0x4, scoped, tag = 'scoped memory for tpu_custom_call.1']
    #allocation10 [shape = 'u8[4096]{0}', space=vmem, size = 0x1000, scoped, tag = 'output window, operand 0, single buffered']
    %12 = vsyncpa [#allocation3], 0
    %13 = vsyncpa [#allocation6], 0
    %14 = vsyncpa [#allocation9], 0
    %15 = vsyncpa [#allocation4], 0
    // Predicated region
    $region2: #{tpu_custom_call.1} parent=1 // pred_check
      _
    $region3: #{tpu_custom_call.1} parent=1 // pred_check_branch
      %17 = sbr.rel (0) target = $region5
    $region4: #{tpu_custom_call.1} parent=1 // pred_region
      %s19 = ssub.s32 64, 64
      %20 = vsyncadd [#allocation3], %s19
      %s22 = sshll.u32 [#allocation2], 4
      %s23 = int_to_ptr.vmem [resolvable:$true] %s22
      %25 = dma.hbm_to_vmem [thread:$0]  %s0, 64, %s23, [#allocation3]
    $region5: #{tpu_custom_call.1} parent=1 // pred_fallthru
      _
    // Predicated region
    $region6: #{tpu_custom_call.1} parent=1 // pred_check
      _
    $region7: #{tpu_custom_call.1} parent=1 // pred_check_branch
      %27 = sbr.rel (0) target = $region9
    $region8: #{tpu_custom_call.1} parent=1 // pred_region
      %s29 = ssub.s32 1024, 1024
      %30 = vsyncadd [#allocation6], %s29
      %s31 = sshll.u32 [#allocation5], 4
      %s32 = int_to_ptr.vmem [resolvable:$true] %s31
      %37 = dma.hbm_to_vmem [thread:$0]  %s1, 1024, %s32, [#allocation6], 64, 64, 4
    $region9: #{tpu_custom_call.1} parent=1 // pred_fallthru
      _
    // Predicated region
    $region10: #{tpu_custom_call.1} parent=1 // pred_check
      _
    $region11: #{tpu_custom_call.1} parent=1 // pred_check_branch
      %39 = sbr.rel (0) target = $region13
    $region12: #{tpu_custom_call.1} parent=1 // pred_region
      _
    $region13: #{tpu_custom_call.1} parent=1 // pred_fallthru
      _
    // Predicated region
    $region14: #{tpu_custom_call.1} parent=1 // pred_check
      _
    $region15: #{tpu_custom_call.1} parent=1 // pred_check_branch
      %41 = sbr.rel (0) target = $region17
    $region16: #{tpu_custom_call.1} parent=1 // pred_region
      %s43 = ssub.s32 1024, 1024
      %44 = vsyncadd [#allocation6], %s43
      %s45 = sshll.u32 [#allocation7], 4
      %s46 = int_to_ptr.vmem [resolvable:$true] %s45
      %51 = dma.hbm_to_vmem [thread:$0]  %s3, 1024, %s46, [#allocation6], 64, 64, 4
    $region17: #{tpu_custom_call.1} parent=1 // pred_fallthru
      _
    // Predicated region
    $region18: #{tpu_custom_call.1} parent=1 // pred_check
      _
    $region19: #{tpu_custom_call.1} parent=1 // pred_check_branch
      %53 = sbr.rel (0) target = $region21
    $region20: #{tpu_custom_call.1} parent=1 // pred_region
      _
    $region21: #{tpu_custom_call.1} parent=1 // pred_fallthru
      _
    // Predicated region
    $region22: #{tpu_custom_call.1} parent=1 // pred_check
      _
    $region23: #{tpu_custom_call.1} parent=1 // pred_check_branch
      %55 = sbr.rel (0) target = $region25
    $region24: #{tpu_custom_call.1} parent=1 // pred_region
      %s57 = ssub.s32 1024, 1024
      %58 = vsyncadd [#allocation9], %s57
      %s59 = sshll.u32 [#allocation8], 4
      %s60 = int_to_ptr.vmem [resolvable:$true] %s59
      %65 = dma.hbm_to_vmem [thread:$0]  %s5, 1024, %s60, [#allocation9], 64, 64, 4
    $region25: #{tpu_custom_call.1} parent=1 // pred_fallthru
      _
    // Predicated region
    $region26: #{tpu_custom_call.1} parent=1 // pred_check
      _
    $region27: #{tpu_custom_call.1} parent=1 // pred_check_branch
      %67 = sbr.rel (0) target = $region29
    $region28: #{tpu_custom_call.1} parent=1 // pred_region
      _
    $region29: #{tpu_custom_call.1} parent=1 // pred_fallthru
      _
    // Predicated region
    $region30: #{tpu_custom_call.1} parent=1 // pred_check
      _
    $region31: #{tpu_custom_call.1} parent=1 // pred_check_branch
      %69 = sbr.rel (0) target = $region33
    $region32: #{tpu_custom_call.1} parent=1 // pred_region
      %70 = dma.done [#allocation3], 64
    $region33: #{tpu_custom_call.1} parent=1 // pred_fallthru
      _
    // Predicated region
    $region34: #{tpu_custom_call.1} parent=1 // pred_check
      _
    $region35: #{tpu_custom_call.1} parent=1 // pred_check_branch
      %72 = sbr.rel (0) target = $region37
    $region36: #{tpu_custom_call.1} parent=1 // pred_region
      %73 = dma.done [#allocation6], 1024
    $region37: #{tpu_custom_call.1} parent=1 // pred_fallthru
      _
    // Predicated region
    $region38: #{tpu_custom_call.1} parent=1 // pred_check
      _
    $region39: #{tpu_custom_call.1} parent=1 // pred_check_branch
      %75 = sbr.rel (0) target = $region41
    $region40: #{tpu_custom_call.1} parent=1 // pred_region
      %76 = dma.done [#allocation6], 1024
    $region41: #{tpu_custom_call.1} parent=1 // pred_fallthru
      _
    // Predicated region
    $region42: #{tpu_custom_call.1} parent=1 // pred_check
      _
    $region43: #{tpu_custom_call.1} parent=1 // pred_check_branch
      %78 = sbr.rel (0) target = $region45
    $region44: #{tpu_custom_call.1} parent=1 // pred_region
      %79 = dma.done [#allocation9], 1024
    $region45: #{tpu_custom_call.1} parent=1 // pred_fallthru
      _
    %v81 = vld [vmem:[#allocation2] sm:$0xf]
    %v82 = vld [vmem:[#allocation5] sm:$0xf]
    %v83 = vld [vmem:[#allocation5 + $0x4] sm:$0xf]
    %v84 = vld [vmem:[#allocation5 + $0x8] sm:$0xf]
    %v85 = vld [vmem:[#allocation5 + $0xc] sm:$0xf]
    %v86 = vld [vmem:[#allocation5 + $0x10] sm:$0xf]
    %v87 = vld [vmem:[#allocation5 + $0x14] sm:$0xf]
    %v88 = vld [vmem:[#allocation5 + $0x18] sm:$0xf]
    %v89 = vld [vmem:[#allocation5 + $0x1c] sm:$0xf]
    %v90 = vld [vmem:[#allocation5 + $0x20] sm:$0xf]
    %v91 = vld [vmem:[#allocation5 + $0x24] sm:$0xf]
    %v92 = vld [vmem:[#allocation5 + $0x28] sm:$0xf]
    %v93 = vld [vmem:[#allocation5 + $0x2c] sm:$0xf]
    %v94 = vld [vmem:[#allocation5 + $0x30] sm:$0xf]
    %v95 = vld [vmem:[#allocation5 + $0x34] sm:$0xf]
    %v96 = vld [vmem:[#allocation5 + $0x38] sm:$0xf]
    %v97 = vld [vmem:[#allocation5 + $0x3c] sm:$0xf]
    %v98 = vld [vmem:[%s2] sm:$0x1]
    %v100 = vlaneseq
    %v101 = vshrl.u32 %v100, 7
    %v102 = vsub.s32 0, %v101
    %v103 = vrot.slane %v98, %v102
    %v121 = vunpack.c.l.b16 %v82
    %v122 = vunpack.c.l.b16 %v83
    %v123 = vunpack.c.l.b16 %v84
    %v124 = vunpack.c.l.b16 %v85
    %v125 = vunpack.c.l.b16 %v86
    %v126 = vunpack.c.l.b16 %v87
    %v127 = vunpack.c.l.b16 %v88
    %v128 = vunpack.c.l.b16 %v89
    %v129 = vunpack.c.l.b16 %v90
    %v130 = vunpack.c.l.b16 %v91
    %v131 = vunpack.c.l.b16 %v92
    %v132 = vunpack.c.l.b16 %v93
    %v133 = vunpack.c.l.b16 %v94
    %v134 = vunpack.c.l.b16 %v95
    %v135 = vunpack.c.l.b16 %v96
    %v136 = vunpack.c.l.b16 %v97
    %v137 = vpack.c.b16 %v122, %v121
    %v138 = vpack.c.b16 %v124, %v123
    %v139 = vpack.c.b16 %v126, %v125
    %v140 = vpack.c.b16 %v128, %v127
    %v141 = vpack.c.b16 %v130, %v129
    %v142 = vpack.c.b16 %v132, %v131
    %v143 = vpack.c.b16 %v134, %v133
    %v144 = vpack.c.b16 %v136, %v135
    %153 = vmatprep.subr.bf16.mxu0 0
    %154 = vmatpush1.bf16.msra.mxu0 %v144
    %155 = vmatprep.subr.bf16.mxu0 0
    %156 = vmatpush1.bf16.msra.mxu0 %v143
    %157 = vmatprep.subr.bf16.mxu0 0
    %158 = vmatpush1.bf16.msra.mxu0 %v142
    %159 = vmatprep.subr.bf16.mxu0 0
    %160 = vmatpush1.bf16.msra.mxu0 %v141
    %161 = vmatprep.subr.bf16.mxu0 0
    %162 = vmatpush1.bf16.msra.mxu0 %v140
    %163 = vmatprep.subr.bf16.mxu0 0
    %164 = vmatpush1.bf16.msra.mxu0 %v139
    %165 = vmatprep.subr.bf16.mxu0 0
    %166 = vmatpush1.bf16.msra.mxu0 %v138
    %167 = vmatprep.subr.bf16.mxu0 0
    %168 = vmatpush1.bf16.msra.mxu0 %v137
    %169 = vmatprep.subr.bf16.mxu0 0
    %170 = vmatpush2.bf16.msra.mxu0 0
    %171 = vmatprep.subr.bf16.mxu0 0
    %172 = vmatpush2.bf16.msra.mxu0 0
    %173 = vmatprep.subr.bf16.mxu0 0
    %174 = vmatpush2.bf16.msra.mxu0 0
    %175 = vmatprep.subr.bf16.mxu0 0
    %176 = vmatpush2.bf16.msra.mxu0 0
    %177 = vmatprep.subr.bf16.mxu0 0
    %178 = vmatpush2.bf16.msra.mxu0 0
    %179 = vmatprep.subr.bf16.mxu0 0
    %180 = vmatpush2.bf16.msra.mxu0 0
    %181 = vmatprep.subr.bf16.mxu0 0
    %182 = vmatpush2.bf16.msra.mxu0 0
    %183 = vmatprep.subr.bf16.mxu0 0
    %184 = vmatpush2.bf16.msra.mxu0 0
    %185 = vmatprep.mubr.bf16.mxu0 0
    %186 = vmatmul.mubr.bf16.gmra.mxu0 %v81
    %v187 = vpop.f32.mrf.mxu0
    %v188 = vadd.f32 %v103, %v187
    %v189 = vpop.f32.mrf.mxu0
    %v190 = vpop.f32.mrf.mxu0
    %v191 = vpop.f32.mrf.mxu0
    %192 = vdwg.mxu0
    %v193 = vmax.f32 %v188, 0.0
    %v194 = vpack.c.bf16 %v193, %v193
    %v195 = vld [vmem:[#allocation7] sm:$0xf]
    %v196 = vld [vmem:[#allocation7 + $0x4] sm:$0xf]
    %v197 = vld [vmem:[#allocation7 + $0x8] sm:$0xf]
    %v198 = vld [vmem:[#allocation7 + $0xc] sm:$0xf]
    %v199 = vld [vmem:[#allocation7 + $0x10] sm:$0xf]
    %v200 = vld [vmem:[#allocation7 + $0x14] sm:$0xf]
    %v201 = vld [vmem:[#allocation7 + $0x18] sm:$0xf]
    %v202 = vld [vmem:[#allocation7 + $0x1c] sm:$0xf]
    %v203 = vld [vmem:[#allocation7 + $0x20] sm:$0xf]
    %v204 = vld [vmem:[#allocation7 + $0x24] sm:$0xf]
    %v205 = vld [vmem:[#allocation7 + $0x28] sm:$0xf]
    %v206 = vld [vmem:[#allocation7 + $0x2c] sm:$0xf]
    %v207 = vld [vmem:[#allocation7 + $0x30] sm:$0xf]
    %v208 = vld [vmem:[#allocation7 + $0x34] sm:$0xf]
    %v209 = vld [vmem:[#allocation7 + $0x38] sm:$0xf]
    %v210 = vld [vmem:[#allocation7 + $0x3c] sm:$0xf]
    %v211 = vld [vmem:[%s4] sm:$0x1]
    %v213 = vlaneseq
    %v214 = vshrl.u32 %v213, 7
    %v215 = vsub.s32 0, %v214
    %v216 = vrot.slane %v211, %v215
    %v234 = vunpack.c.l.b16 %v195
    %v235 = vunpack.c.l.b16 %v196
    %v236 = vunpack.c.l.b16 %v197
    %v237 = vunpack.c.l.b16 %v198
    %v238 = vunpack.c.l.b16 %v199
    %v239 = vunpack.c.l.b16 %v200
    %v240 = vunpack.c.l.b16 %v201
    %v241 = vunpack.c.l.b16 %v202
    %v242 = vunpack.c.l.b16 %v203
    %v243 = vunpack.c.l.b16 %v204
    %v244 = vunpack.c.l.b16 %v205
    %v245 = vunpack.c.l.b16 %v206
    %v246 = vunpack.c.l.b16 %v207
    %v247 = vunpack.c.l.b16 %v208
    %v248 = vunpack.c.l.b16 %v209
    %v249 = vunpack.c.l.b16 %v210
    %v250 = vpack.c.b16 %v235, %v234
    %v251 = vpack.c.b16 %v237, %v236
    %v252 = vpack.c.b16 %v239, %v238
    %v253 = vpack.c.b16 %v241, %v240
    %v254 = vpack.c.b16 %v243, %v242
    %v255 = vpack.c.b16 %v245, %v244
    %v256 = vpack.c.b16 %v247, %v246
    %v257 = vpack.c.b16 %v249, %v248
    %266 = vmatprep.subr.bf16.mxu0 0
    %267 = vmatpush1.bf16.msra.mxu0 %v257
    %268 = vmatprep.subr.bf16.mxu0 0
    %269 = vmatpush1.bf16.msra.mxu0 %v256
    %270 = vmatprep.subr.bf16.mxu0 0
    %271 = vmatpush1.bf16.msra.mxu0 %v255
    %272 = vmatprep.subr.bf16.mxu0 0
    %273 = vmatpush1.bf16.msra.mxu0 %v254
    %274 = vmatprep.subr.bf16.mxu0 0
    %275 = vmatpush1.bf16.msra.mxu0 %v253
    %276 = vmatprep.subr.bf16.mxu0 0
    %277 = vmatpush1.bf16.msra.mxu0 %v252
    %278 = vmatprep.subr.bf16.mxu0 0
    %279 = vmatpush1.bf16.msra.mxu0 %v251
    %280 = vmatprep.subr.bf16.mxu0 0
    %281 = vmatpush1.bf16.msra.mxu0 %v250
    %282 = vmatprep.subr.bf16.mxu0 0
    %283 = vmatpush2.bf16.msra.mxu0 0
    %284 = vmatprep.subr.bf16.mxu0 0
    %285 = vmatpush2.bf16.msra.mxu0 0
    %286 = vmatprep.subr.bf16.mxu0 0
    %287 = vmatpush2.bf16.msra.mxu0 0
    %288 = vmatprep.subr.bf16.mxu0 0
    %289 = vmatpush2.bf16.msra.mxu0 0
    %290 = vmatprep.subr.bf16.mxu0 0
    %291 = vmatpush2.bf16.msra.mxu0 0
    %292 = vmatprep.subr.bf16.mxu0 0
    %293 = vmatpush2.bf16.msra.mxu0 0
    %294 = vmatprep.subr.bf16.mxu0 0
    %295 = vmatpush2.bf16.msra.mxu0 0
    %296 = vmatprep.subr.bf16.mxu0 0
    %297 = vmatpush2.bf16.msra.mxu0 0
    %298 = vmatprep.mubr.bf16.mxu0 0
    %299 = vmatmul.mubr.bf16.gmra.mxu0 %v194
    %v300 = vpop.f32.mrf.mxu0
    %v301 = vadd.f32 %v216, %v300
    %v302 = vpop.f32.mrf.mxu0
    %v303 = vpop.f32.mrf.mxu0
    %v304 = vpop.f32.mrf.mxu0
    %305 = vdwg.mxu0
    %v306 = vmax.f32 %v301, 0.0
    %v307 = vpack.c.bf16 %v306, %v306
    %v308 = vld [vmem:[#allocation8] sm:$0xf]
    %v309 = vld [vmem:[#allocation8 + $0x4] sm:$0xf]
    %v310 = vld [vmem:[#allocation8 + $0x8] sm:$0xf]
    %v311 = vld [vmem:[#allocation8 + $0xc] sm:$0xf]
    %v312 = vld [vmem:[#allocation8 + $0x10] sm:$0xf]
    %v313 = vld [vmem:[#allocation8 + $0x14] sm:$0xf]
    %v314 = vld [vmem:[#allocation8 + $0x18] sm:$0xf]
    %v315 = vld [vmem:[#allocation8 + $0x1c] sm:$0xf]
    %v316 = vld [vmem:[#allocation8 + $0x20] sm:$0xf]
    %v317 = vld [vmem:[#allocation8 + $0x24] sm:$0xf]
    %v318 = vld [vmem:[#allocation8 + $0x28] sm:$0xf]
    %v319 = vld [vmem:[#allocation8 + $0x2c] sm:$0xf]
    %v320 = vld [vmem:[#allocation8 + $0x30] sm:$0xf]
    %v321 = vld [vmem:[#allocation8 + $0x34] sm:$0xf]
    %v322 = vld [vmem:[#allocation8 + $0x38] sm:$0xf]
    %v323 = vld [vmem:[#allocation8 + $0x3c] sm:$0xf]
    %v324 = vld [vmem:[%s6] sm:$0x1]
    %v326 = vlaneseq
    %v327 = vshrl.u32 %v326, 7
    %v328 = vsub.s32 0, %v327
    %v329 = vrot.slane %v324, %v328
    %v347 = vunpack.c.l.b16 %v308
    %v348 = vunpack.c.l.b16 %v309
    %v349 = vunpack.c.l.b16 %v310
    %v350 = vunpack.c.l.b16 %v311
    %v351 = vunpack.c.l.b16 %v312
    %v352 = vunpack.c.l.b16 %v313
    %v353 = vunpack.c.l.b16 %v314
    %v354 = vunpack.c.l.b16 %v315
    %v355 = vunpack.c.l.b16 %v316
    %v356 = vunpack.c.l.b16 %v317
    %v357 = vunpack.c.l.b16 %v318
    %v358 = vunpack.c.l.b16 %v319
    %v359 = vunpack.c.l.b16 %v320
    %v360 = vunpack.c.l.b16 %v321
    %v361 = vunpack.c.l.b16 %v322
    %v362 = vunpack.c.l.b16 %v323
    %v363 = vpack.c.b16 %v348, %v347
    %v364 = vpack.c.b16 %v350, %v349
    %v365 = vpack.c.b16 %v352, %v351
    %v366 = vpack.c.b16 %v354, %v353
    %v367 = vpack.c.b16 %v356, %v355
    %v368 = vpack.c.b16 %v358, %v357
    %v369 = vpack.c.b16 %v360, %v359
    %v370 = vpack.c.b16 %v362, %v361
    %379 = vmatprep.subr.bf16.mxu0 0
    %380 = vmatpush1.bf16.msra.mxu0 %v370
    %381 = vmatprep.subr.bf16.mxu0 0
    %382 = vmatpush1.bf16.msra.mxu0 %v369
    %383 = vmatprep.subr.bf16.mxu0 0
    %384 = vmatpush1.bf16.msra.mxu0 %v368
    %385 = vmatprep.subr.bf16.mxu0 0
    %386 = vmatpush1.bf16.msra.mxu0 %v367
    %387 = vmatprep.subr.bf16.mxu0 0
    %388 = vmatpush1.bf16.msra.mxu0 %v366
    %389 = vmatprep.subr.bf16.mxu0 0
    %390 = vmatpush1.bf16.msra.mxu0 %v365
    %391 = vmatprep.subr.bf16.mxu0 0
    %392 = vmatpush1.bf16.msra.mxu0 %v364
    %393 = vmatprep.subr.bf16.mxu0 0
    %394 = vmatpush1.bf16.msra.mxu0 %v363
    %395 = vmatprep.subr.bf16.mxu0 0
    %396 = vmatpush2.bf16.msra.mxu0 0
    %397 = vmatprep.subr.bf16.mxu0 0
    %398 = vmatpush2.bf16.msra.mxu0 0
    %399 = vmatprep.subr.bf16.mxu0 0
    %400 = vmatpush2.bf16.msra.mxu0 0
    %401 = vmatprep.subr.bf16.mxu0 0
    %402 = vmatpush2.bf16.msra.mxu0 0
    %403 = vmatprep.subr.bf16.mxu0 0
    %404 = vmatpush2.bf16.msra.mxu0 0
    %405 = vmatprep.subr.bf16.mxu0 0
    %406 = vmatpush2.bf16.msra.mxu0 0
    %407 = vmatprep.subr.bf16.mxu0 0
    %408 = vmatpush2.bf16.msra.mxu0 0
    %409 = vmatprep.subr.bf16.mxu0 0
    %410 = vmatpush2.bf16.msra.mxu0 0
    %411 = vmatprep.mubr.bf16.mxu0 0
    %412 = vmatmul.mubr.bf16.gmra.mxu0 %v307
    %v413 = vpop.f32.mrf.mxu0
    %v414 = vadd.f32 %v329, %v413
    %v415 = vpop.f32.mrf.mxu0
    %v416 = vpop.f32.mrf.mxu0
    %v417 = vpop.f32.mrf.mxu0
    %418 = vdwg.mxu0
    %419 = vst [vmem:[#allocation10] sm:$0xff] %v414
    // Predicated region
    $region46: #{tpu_custom_call.1} parent=1 // pred_check
      _
    $region47: #{tpu_custom_call.1} parent=1 // pred_check_branch
      %421 = sbr.rel (0) target = $region49
    $region48: #{tpu_custom_call.1} parent=1 // pred_region
      %s423 = ssub.s32 128, 128
      %424 = vsyncadd [#allocation4], %s423
      %s426 = sshll.u32 [#allocation10], 4
      %s427 = int_to_ptr.vmem [resolvable:$true] %s426
      %429 = dma.vmem_to_hbm [thread:$0]  %s427, 128, %s7, [#allocation4]
    $region49: #{tpu_custom_call.1} parent=1 // pred_fallthru
      _
    // Predicated region
    $region50: #{tpu_custom_call.1} parent=1 // pred_check
      _
    $region51: #{tpu_custom_call.1} parent=1 // pred_check_branch
      %431 = sbr.rel (0) target = $region53
    $region52: #{tpu_custom_call.1} parent=1 // pred_region
      %432 = dma.done [#allocation4], 128
    $region53: #{tpu_custom_call.1} parent=1 // pred_fallthru
      _
    %433 = vsyncpa [#allocation3], 1
    %434 = vsyncpa [#allocation6], 1
    %435 = vsyncpa [#allocation9], 1
    %436 = vsyncpa [#allocation4], 1

// kernel: tpu_custom_call.1
$region0: #{tpu_custom_call.1}
  #allocation0 [shape = 'u32[]', space=smem, size = 0x4, offset = 0x4, fixed_abs, tag = 'smem constant byte address 0x4 - core index']
  #allocation1 [shape = 'u32[144,128]{1,0:T(1,128)}', space=vmem, size = 0x12000, scoped, tag = 'internal scratch']
  #allocation2 [shape = 'f32[8,128]{1,0:T(8,128)}', space=vmem, size = 0x1000, scoped, tag = 'scratch operand']
  %s0 = inlined_call_operand.hbm [shape: bf16[8,128], index: 0, kind: input, shape index: {}]
  %s1 = inlined_call_operand.hbm [shape: bf16[128,128], index: 1, kind: input, shape index: {}]
  %s2 = inlined_call_operand.vmem [shape: f32[1,128], index: 2, kind: input, shape index: {}]
  %s3 = inlined_call_operand.hbm [shape: bf16[8,128], index: 3, kind: output, shape index: {}]
  %s4 = sld [smem:[#allocation0]]
  $region38: #{tpu_custom_call.1} parent=0
    _
  %s6 = ssub.s32 1, %s4
  %s7 = scalar_select 0, %s6, %s4
  $region1: #{tpu_custom_call.1} parent=0
    #allocation3 [shape = 'u8[2048]{0}', space=vmem, size = 0x800, scoped, tag = 'input window, operand 0, single buffered']
    #allocation4 [shape = 's32[1]{0}', space=sflag, size = 0x4, scoped, tag = 'scoped memory for tpu_custom_call.1']
    #allocation5 [shape = 's32[1]{0}', space=sflag, size = 0x4, scoped, tag = 'scoped memory for tpu_custom_call.1']
    #allocation6 [shape = 'u8[32768]{0}', space=vmem, size = 0x8000, scoped, tag = 'input window, operand 1, single buffered']
    #allocation7 [shape = 's32[1]{0}', space=sflag, size = 0x4, scoped, tag = 'scoped memory for tpu_custom_call.1']
    #allocation8 [shape = 'u8[2048]{0}', space=vmem, size = 0x800, scoped, tag = 'output window, operand 0, single buffered']
    %8 = vsyncpa [#allocation4], 0
    %9 = vsyncpa [#allocation7], 0
    %10 = vsyncpa [#allocation5], 0
    // Predicated region
    $region2: #{tpu_custom_call.1} parent=1 // pred_check
      _
    $region3: #{tpu_custom_call.1} parent=1 // pred_check_branch
      %12 = sbr.rel (0) target = $region5
    $region4: #{tpu_custom_call.1} parent=1 // pred_region
      %s14 = ssub.s32 64, 64
      %15 = vsyncadd [#allocation4], %s14
      %s17 = sshll.u32 [#allocation3], 4
      %s18 = int_to_ptr.vmem [resolvable:$true] %s17
      %20 = dma.hbm_to_vmem [thread:$0]  %s0, 64, %s18, [#allocation4]
    $region5: #{tpu_custom_call.1} parent=1 // pred_fallthru
      _
    // Predicated region
    $region6: #{tpu_custom_call.1} parent=1 // pred_check
      _
    $region7: #{tpu_custom_call.1} parent=1 // pred_check_branch
      %22 = sbr.rel (0) target = $region9
    $region8: #{tpu_custom_call.1} parent=1 // pred_region
      %s24 = ssub.s32 1024, 1024
      %25 = vsyncadd [#allocation7], %s24
      %s26 = sshll.u32 [#allocation6], 4
      %s27 = int_to_ptr.vmem [resolvable:$true] %s26
      %32 = dma.hbm_to_vmem [thread:$0]  %s1, 1024, %s27, [#allocation7], 64, 64, 4
    $region9: #{tpu_custom_call.1} parent=1 // pred_fallthru
      _
    // Predicated region
    $region10: #{tpu_custom_call.1} parent=1 // pred_check
      _
    $region11: #{tpu_custom_call.1} parent=1 // pred_check_branch
      %34 = sbr.rel (0) target = $region13
    $region12: #{tpu_custom_call.1} parent=1 // pred_region
      _
    $region13: #{tpu_custom_call.1} parent=1 // pred_fallthru
      _
    // Predicated region
    $region14: #{tpu_custom_call.1} parent=1 // pred_check
      _
    $region15: #{tpu_custom_call.1} parent=1 // pred_check_branch
      %36 = sbr.rel (0) target = $region17
    $region16: #{tpu_custom_call.1} parent=1 // pred_region
      %37 = dma.done [#allocation4], 64
    $region17: #{tpu_custom_call.1} parent=1 // pred_fallthru
      _
    // Predicated region
    $region18: #{tpu_custom_call.1} parent=1 // pred_check
      _
    $region19: #{tpu_custom_call.1} parent=1 // pred_check_branch
      %39 = sbr.rel (0) target = $region21
    $region20: #{tpu_custom_call.1} parent=1 // pred_region
      %40 = dma.done [#allocation7], 1024
    $region21: #{tpu_custom_call.1} parent=1 // pred_fallthru
      _
    %p42 = scmp.eq.s32.totalorder 0, 0
    // Predicated region
    $region22: #{tpu_custom_call.1} parent=1 // pred_check
      %p43 = pneg %p42
    $region23: #{tpu_custom_call.1} parent=1 // pred_check_branch
      %45 = sbr.rel (%p43) target = $region25
    $region24: #{tpu_custom_call.1} parent=1 // pred_region
      %46 = vst [vmem:[#allocation2] sm:$0xff] 0.0
    $region25: #{tpu_custom_call.1} parent=1 // pred_fallthru
      _
    %v47 = vld [vmem:[#allocation2] sm:$0xff]
    %v48 = vld [vmem:[#allocation3] sm:$0xf]
    %v49 = vld [vmem:[#allocation6] sm:$0xf]
    %v50 = vld [vmem:[#allocation6 + $0x4] sm:$0xf]
    %v51 = vld [vmem:[#allocation6 + $0x8] sm:$0xf]
    %v52 = vld [vmem:[#allocation6 + $0xc] sm:$0xf]
    %v53 = vld [vmem:[#allocation6 + $0x10] sm:$0xf]
    %v54 = vld [vmem:[#allocation6 + $0x14] sm:$0xf]
    %v55 = vld [vmem:[#allocation6 + $0x18] sm:$0xf]
    %v56 = vld [vmem:[#allocation6 + $0x1c] sm:$0xf]
    %v57 = vld [vmem:[#allocation6 + $0x20] sm:$0xf]
    %v58 = vld [vmem:[#allocation6 + $0x24] sm:$0xf]
    %v59 = vld [vmem:[#allocation6 + $0x28] sm:$0xf]
    %v60 = vld [vmem:[#allocation6 + $0x2c] sm:$0xf]
    %v61 = vld [vmem:[#allocation6 + $0x30] sm:$0xf]
    %v62 = vld [vmem:[#allocation6 + $0x34] sm:$0xf]
    %v63 = vld [vmem:[#allocation6 + $0x38] sm:$0xf]
    %v64 = vld [vmem:[#allocation6 + $0x3c] sm:$0xf]
    %v81 = vunpack.c.l.b16 %v49
    %v82 = vunpack.c.l.b16 %v50
    %v83 = vunpack.c.l.b16 %v51
    %v84 = vunpack.c.l.b16 %v52
    %v85 = vunpack.c.l.b16 %v53
    %v86 = vunpack.c.l.b16 %v54
    %v87 = vunpack.c.l.b16 %v55
    %v88 = vunpack.c.l.b16 %v56
    %v89 = vunpack.c.l.b16 %v57
    %v90 = vunpack.c.l.b16 %v58
    %v91 = vunpack.c.l.b16 %v59
    %v92 = vunpack.c.l.b16 %v60
    %v93 = vunpack.c.l.b16 %v61
    %v94 = vunpack.c.l.b16 %v62
    %v95 = vunpack.c.l.b16 %v63
    %v96 = vunpack.c.l.b16 %v64
    %v97 = vpack.c.b16 %v82, %v81
    %v98 = vpack.c.b16 %v84, %v83
    %v99 = vpack.c.b16 %v86, %v85
    %v100 = vpack.c.b16 %v88, %v87
    %v101 = vpack.c.b16 %v90, %v89
    %v102 = vpack.c.b16 %v92, %v91
    %v103 = vpack.c.b16 %v94, %v93
    %v104 = vpack.c.b16 %v96, %v95
    %113 = vmatprep.subr.bf16.mxu0 0
    %114 = vmatpush1.bf16.msra.mxu0 %v104
    %115 = vmatprep.subr.bf16.mxu0 0
    %116 = vmatpush1.bf16.msra.mxu0 %v103
    %117 = vmatprep.subr.bf16.mxu0 0
    %118 = vmatpush1.bf16.msra.mxu0 %v102
    %119 = vmatprep.subr.bf16.mxu0 0
    %120 = vmatpush1.bf16.msra.mxu0 %v101
    %121 = vmatprep.subr.bf16.mxu0 0
    %122 = vmatpush1.bf16.msra.mxu0 %v100
    %123 = vmatprep.subr.bf16.mxu0 0
    %124 = vmatpush1.bf16.msra.mxu0 %v99
    %125 = vmatprep.subr.bf16.mxu0 0
    %126 = vmatpush1.bf16.msra.mxu0 %v98
    %127 = vmatprep.subr.bf16.mxu0 0
    %128 = vmatpush1.bf16.msra.mxu0 %v97
    %129 = vmatprep.subr.bf16.mxu0 0
    %130 = vmatpush2.bf16.msra.mxu0 0
    %131 = vmatprep.subr.bf16.mxu0 0
    %132 = vmatpush2.bf16.msra.mxu0 0
    %133 = vmatprep.subr.bf16.mxu0 0
    %134 = vmatpush2.bf16.msra.mxu0 0
    %135 = vmatprep.subr.bf16.mxu0 0
    %136 = vmatpush2.bf16.msra.mxu0 0
    %137 = vmatprep.subr.bf16.mxu0 0
    %138 = vmatpush2.bf16.msra.mxu0 0
    %139 = vmatprep.subr.bf16.mxu0 0
    %140 = vmatpush2.bf16.msra.mxu0 0
    %141 = vmatprep.subr.bf16.mxu0 0
    %142 = vmatpush2.bf16.msra.mxu0 0
    %143 = vmatprep.subr.bf16.mxu0 0
    %144 = vmatpush2.bf16.msra.mxu0 0
    %145 = vmatprep.mubr.bf16.mxu0 0
    %146 = vmatmul.mubr.bf16.gmra.mxu0 %v48
    %v147 = vpop.f32.mrf.mxu0
    %v148 = vadd.f32 0.0, %v147
    %v149 = vpop.f32.mrf.mxu0
    %v150 = vpop.f32.mrf.mxu0
    %v151 = vpop.f32.mrf.mxu0
    %152 = vdwg.mxu0
    %v153 = vadd.f32 %v47, %v148
    %154 = vst [vmem:[#allocation2] sm:$0xff] %v153
    // Predicated region
    $region26: #{tpu_custom_call.1} parent=1 // pred_check
      %p155 = pneg %p42
    $region27: #{tpu_custom_call.1} parent=1 // pred_check_branch
      %157 = sbr.rel (%p155) target = $region29
    $region28: #{tpu_custom_call.1} parent=1 // pred_region
      %v158 = vld [vmem:[#allocation2] sm:$0xff]
      %v159 = vld [vmem:[%s2] sm:$0x1]
      %v161 = vlaneseq
      %v162 = vshrl.u32 %v161, 7
      %v163 = vsub.s32 0, %v162
      %v164 = vrot.slane %v159, %v163
      %v166 = vadd.f32 %v158, %v164
      %v167 = vmax.f32 %v166, 0.0
      %v168 = vpack.c.bf16 %v167, %v167
      %169 = vst [vmem:[#allocation8] sm:$0xf] %v168
    $region29: #{tpu_custom_call.1} parent=1 // pred_fallthru
      _
    // Predicated region
    $region30: #{tpu_custom_call.1} parent=1 // pred_check
      _
    $region31: #{tpu_custom_call.1} parent=1 // pred_check_branch
      %171 = sbr.rel (0) target = $region33
    $region32: #{tpu_custom_call.1} parent=1 // pred_region
      %s173 = ssub.s32 64, 64
      %174 = vsyncadd [#allocation5], %s173
      %s176 = sshll.u32 [#allocation8], 4
      %s177 = int_to_ptr.vmem [resolvable:$true] %s176
      %179 = dma.vmem_to_hbm [thread:$0]  %s177, 64, %s3, [#allocation5]
    $region33: #{tpu_custom_call.1} parent=1 // pred_fallthru
      _
    // Predicated region
    $region34: #{tpu_custom_call.1} parent=1 // pred_check
      _
    $region35: #{tpu_custom_call.1} parent=1 // pred_check_branch
      %181 = sbr.rel (0) target = $region37
    $region36: #{tpu_custom_call.1} parent=1 // pred_region
      %182 = dma.done [#allocation5], 64
    $region37: #{tpu_custom_call.1} parent=1 // pred_fallthru
      _
    %183 = vsyncpa [#allocation4], 1
    %184 = vsyncpa [#allocation7], 1
    %185 = vsyncpa [#allocation5], 1

</llo_original>
